<compile_context>
chip_gen: v7x
topology: tpu7x:2x2x1
jax: 0.10.0
libtpu: 0.0.40
codegen_flags: <defaults>
</compile_context>

<pallas_src>
import jax
import jax.numpy as jnp
import numpy as np
from jax.experimental import pallas as pl
from jax.experimental.pallas import tpu as pltpu

LN_EPS = 1e-5  # torch.nn.LayerNorm default

# Natural chunk q (parity bits hp*4 + wp*2 + tp of the 2x2x2 neighborhood)
# -> index of the corresponding chunk in the PyTorch concat order [x0..x7].
_PERM = (0, 3, 2, 5, 1, 6, 4, 7)


def _round_up(x, m):
    return (x + m - 1) // m * m


# ----------------------------------------------------------------------------
# Pallas kernel: fused gather + LayerNorm(8C) + matmul (8C -> tn)
# ----------------------------------------------------------------------------
def _patch_merge_kernel(x00_ref, x01_ref, x10_ref, x11_ref, w_ref, b_ref, o_ref):
    """One (bw * T2)-token tile.

    x??_ref: (bw, T2, 2C)  quadrant (hp, wp) of the 2x2x2 neighborhood; each row
             is the contiguous HBM slab x[b, 2h2+hp, 2w2+wp, 2t2:2t2+2, :],
             i.e. features already in natural (tp, c) order.
    w_ref:   (4, 2C, tn)   bf16, natural (hp, wp, tp, c) row order, gamma folded in.
    b_ref:   (1, tn)       f32, = beta @ W^T (LayerNorm bias pushed through matmul).
    o_ref:   (bw, T2, tn)
    """
    xs = [
        x00_ref[...].astype(jnp.float32),
        x01_ref[...].astype(jnp.float32),
        x10_ref[...].astype(jnp.float32),
        x11_ref[...].astype(jnp.float32),
    ]
    inv_c8 = 1.0 / (4 * xs[0].shape[-1])

    # Two-pass LayerNorm statistics in f32 (mean, then centered variance).
    s1 = xs[0].sum(-1, keepdims=True)
    for x in xs[1:]:
        s1 = s1 + x.sum(-1, keepdims=True)
    mean = s1 * inv_c8                                          # (bw, T2, 1)
    xc = [x - mean for x in xs]
    s2 = (xc[0] * xc[0]).sum(-1, keepdims=True)
    for c in xc[1:]:
        s2 = s2 + (c * c).sum(-1, keepdims=True)
    inv_std = jax.lax.rsqrt(s2 * inv_c8 + LN_EPS)               # EUP

    xh = [(c * inv_std).astype(jnp.bfloat16) for c in xc]       # bf16 MXU operands
    w = w_ref[...]                                              # (4, 2C, tn) bf16
    bias = b_ref[...]                                           # (1, tn) f32

    bw = xh[0].shape[0]
    for wi in range(bw):                                        # static, unrolled
        acc = jnp.dot(xh[0][wi], w[0], preferred_element_type=jnp.float32)
        for q in range(1, 4):
            acc = acc + jnp.dot(xh[q][wi], w[q], preferred_element_type=jnp.float32)
        o_ref[wi] = (acc + bias).astype(o_ref.dtype)


# ----------------------------------------------------------------------------
# VMEM budgeting / tile selection (generation-aware)
# ----------------------------------------------------------------------------
def _vmem_budget():
    """Scoped-VMEM limit + usable budget (v5e/v6e: 128 MiB phys, v7x: 64 MiB/TC)."""
    try:
        phys = int(pltpu.get_tpu_info().vmem_capacity_bytes)
    except Exception:
        phys = 64 * 1024 * 1024                 # conservative fallback (v7x per-TC)
    limit = max(16 * 1024 * 1024, min(phys // 2, 64 * 1024 * 1024))
    return limit, (limit * 3) // 4


def _choose_tiles(B, H2, W2, T2, C, Cout, in_itemsize, out_itemsize, budget):
    """Pick the W2-tile (bw) and the output-column tile (tn).

    Charges double-buffered input/output blocks, the double-buffered resident
    weight + bias, and the in-kernel f32/bf16 temporaries at padded VMEM tile
    sizes (review: the old estimate undercounted temps and the 2x weight).
    """
    sub = {4: 8, 2: 16, 1: 32}
    c2p = _round_up(2 * C, 128)
    t_in = _round_up(T2, sub.get(in_itemsize, 8))
    t_f32, t_bf16 = _round_up(T2, 8), _round_up(T2, 16)
    t_out = _round_up(T2, sub.get(out_itemsize, 8))

    def weight_bytes(tn):
        tnp = _round_up(tn, 128)
        return 2 * 4 * _round_up(2 * C, 16) * tnp * 2 + 2 * 8 * tnp * 4

    # Output-column tiling keeps the streamed weight bounded for large C.
    tn = Cout
    if Cout % 128 == 0:
        for cand in [k * 128 for k in range(Cout // 128, 0, -1) if Cout % (k * 128) == 0]:
            tn = cand
            if weight_bytes(cand) <= budget // 3:
                break
    # TODO(synk): for a huge Cout that is not 128-divisible, pad Cout and fuse
    # the consumer instead of keeping the whole weight resident.

    fixed = weight_bytes(tn) + (512 << 10)
    tnp = _round_up(tn, 128)

    def step_bytes(bw):
        inp = 4 * 2 * bw * t_in * c2p * in_itemsize           # 4 quadrants, double-buffered
        tmp = 4 * bw * (t_f32 * c2p * 4 + t_bf16 * c2p * 2)   # f32 centered + bf16 xhat
        out = 2 * bw * t_out * tnp * out_itemsize             # output, double-buffered
        return inp + tmp + out + 2 * t_f32 * tnp * 4          # + f32 accumulator

    # Keep >= 2 grid steps so both v7x TensorCores get work on tiny layers.
    need_split = (B * H2 == 1 and W2 >= 2)
    bw = 1
    for d in range(W2, 0, -1):
        if W2 % d:
            continue
        if need_split and W2 // d < 2:
            continue
        if fixed + step_bytes(d) <= budget:
            bw = d
            break
    return bw, tn


# ----------------------------------------------------------------------------
# pallas_call wrapper
# ----------------------------------------------------------------------------
def _fused_patch_merge(x7, w4, bias_row, B, H2, W2, T2, C, Cout, *,
                       bw, tn, out_dtype, vmem_limit):
    C2 = 2 * C
    grid = (B, H2, W2 // bw, Cout // tn)

    chunk_specs = [
        pl.BlockSpec(
            (None, None, None, bw, None, T2, C2),
            lambda b, h, wi, j, hp=hp, wp=wp: (b, h, hp, wi, wp, 0, 0),
        )
        for hp in (0, 1) for wp in (0, 1)        # chunk q = hp*2 + wp
    ]
    w_spec = pl.BlockSpec((4, C2, tn), lambda b, h, wi, j: (0, 0, j))
    b_spec = pl.BlockSpec((1, tn), lambda b, h, wi, j: (0, j))
    out_spec = pl.BlockSpec((None, None, bw, T2, tn),
                            lambda b, h, wi, j: (b, h, wi, 0, j))

    return pl.pallas_call(
        _patch_merge_kernel,
        out_shape=jax.ShapeDtypeStruct((B, H2, W2, T2, Cout), out_dtype),
        grid_spec=pltpu.PrefetchScalarGridSpec(
            num_scalar_prefetch=0,
            grid=grid,
            in_specs=chunk_specs + [w_spec, b_spec],
            out_specs=out_spec,
        ),
        compiler_params=pltpu.CompilerParams(
            dimension_semantics=("parallel", "parallel", "parallel", "arbitrary"),
            vmem_limit_bytes=int(vmem_limit),
        ),
    )(x7, x7, x7, x7, w4, bias_row)


# ----------------------------------------------------------------------------
# PatchMerging forward
# ----------------------------------------------------------------------------
def patch_merging_forward(x, H, W, T, params, *, out_dtype=None):
    """
    x: (B, L, C) with L == H*W*T, all of H, W, T even.
    params: dict with
        'norm_weight': (8C,), 'norm_bias': (8C,),
        'reduction_weight': (Cout, 8C)   (PyTorch nn.Linear layout)
    returns: (B, L//8, Cout)
    """
    B, L, C = x.shape
    assert L == H * W * T, "input feature has wrong size"
    assert H % 2 == 0 and W % 2 == 0 and T % 2 == 0, "x size not even"
    # TODO(synk): the module's odd-size pad branch is dead code under the even
    # asserts above and is not implemented here.
    H2, W2, T2 = H // 2, W // 2, T // 2
    C2 = 2 * C
    out_dtype = x.dtype if out_dtype is None else jnp.dtype(out_dtype)

    # Free (contiguous) view exposing the 2x2x2 parity structure; no data moves.
    x7 = x.reshape(B, H2, 2, W2, 2, T2, C2)

    # Fold LayerNorm gamma into the natural-order weight; push beta through the
    # matmul.  Chunk q = hp*2 + wp of w4 holds rows in contiguous (tp, c) order.
    gamma = params["norm_weight"].astype(jnp.float32)              # (8C,)
    beta = params["norm_bias"].astype(jnp.float32)                 # (8C,)
    w_t = params["reduction_weight"].T.astype(jnp.float32)         # (8C, Cout)
    Cout = w_t.shape[1]
    idx = np.concatenate([np.arange(p * C, (p + 1) * C) for p in _PERM])
    w_eff = (gamma[idx][:, None] * w_t[idx]).astype(jnp.bfloat16)  # natural order
    w4 = w_eff.reshape(4, C2, Cout)
    bias_row = (beta @ w_t).reshape(1, Cout).astype(jnp.float32)   # perm-invariant

    vmem_limit, budget = _vmem_budget()
    in_b = jnp.dtype(x.dtype).itemsize
    out_b = jnp.dtype(out_dtype).itemsize
    bw, tn = _choose_tiles(B, H2, W2, T2, C, Cout, in_b, out_b, budget)

    out5 = _fused_patch_merge(x7, w4, bias_row, B, H2, W2, T2, C, Cout,
                              bw=bw, tn=tn, out_dtype=out_dtype,
                              vmem_limit=vmem_limit)
    return out5.reshape(B, H2 * W2 * T2, Cout)


# ----------------------------------------------------------------------------
# Pure-JAX reference for verification (torch ordering, f32 math)
# ----------------------------------------------------------------------------
def patch_merging_ref(x, H, W, T, params):
    B, L, C = x.shape
    x = x.reshape(B, H, W, T, C)
    xs = [
        x[:, 0::2, 0::2, 0::2, :],
        x[:, 1::2, 0::2, 0::2, :],
        x[:, 0::2, 1::2, 0::2, :],
        x[:, 0::2, 0::2, 1::2, :],
        x[:, 1::2, 1::2, 0::2, :],
        x[:, 0::2, 1::2, 1::2, :],
        x[:, 1::2, 0::2, 1::2, :],
        x[:, 1::2, 1::2, 1::2, :],
    ]
    xm = jnp.concatenate(xs, axis=-1).reshape(B, L // 8, 8 * C).astype(jnp.float32)
    mean = jnp.mean(xm, axis=-1, keepdims=True)
    var = jnp.mean((xm - mean) ** 2, axis=-1, keepdims=True)
    xn = (xm - mean) / jnp.sqrt(var + LN_EPS)
    xn = xn * params["norm_weight"] + params["norm_bias"]
    return xn @ params["reduction_weight"].T


if __name__ == "__main__":
    # Small, module-consistent shapes: dim=C=16, (H, W, T) = (8, 8, 8), B=2.
    B, H, W, T, C = 2, 8, 8, 8, 16
    reduce_factor = 2
    C8 = 8 * C                       # 128
    Cout = 8 // reduce_factor * C    # 64
    L = H * W * T                    # 512

    key = jax.random.PRNGKey(0)
    kx, kw, kg, kb = jax.random.split(key, 4)

    x = jax.random.normal(kx, (B, L, C), dtype=jnp.float32)
    params = {
        "reduction_weight": jax.random.normal(kw, (Cout, C8), jnp.float32) * 0.02,
        "norm_weight": jnp.ones((C8,), jnp.float32)
        + 0.01 * jax.random.normal(kg, (C8,), jnp.float32),
        "norm_bias": 0.01 * jax.random.normal(kb, (C8,), jnp.float32),
    }

    fwd = jax.jit(lambda xx, pp: patch_merging_forward(xx, H, W, T, pp))
    out = jax.block_until_ready(fwd(x, params))

    ref = patch_merging_ref(x, H, W, T, params)
    assert out.shape == (B, L // 8, Cout), out.shape
    max_err = float(jnp.max(jnp.abs(out - ref)))
    # bf16 MXU operands -> slightly looser tolerance than a pure-f32 path.
    assert jnp.allclose(out, ref, atol=2e-2, rtol=2e-2), max_err
    print("KERNEL_OK")
</pallas_src>

<mosaic_0001>
module attributes {stable_mosaic.version = 11 : i64} {
  func.func @_patch_merge_kernel(%arg0: i32, %arg1: i32, %arg2: i32, %arg3: i32, %arg4: memref<1x1x1x4x1x4x32xf32, #tpu.memory_space<vmem>>, %arg5: memref<1x1x1x4x1x4x32xf32, #tpu.memory_space<vmem>>, %arg6: memref<1x1x1x4x1x4x32xf32, #tpu.memory_space<vmem>>, %arg7: memref<1x1x1x4x1x4x32xf32, #tpu.memory_space<vmem>>, %arg8: memref<4x32x64xbf16, #tpu.memory_space<vmem>>, %arg9: memref<1x64xf32, #tpu.memory_space<vmem>>, %arg10: memref<1x1x4x4x64xf32, #tpu.memory_space<vmem>>) attributes {dimension_semantics = [#tpu.dimension_semantics<parallel>, #tpu.dimension_semantics<parallel>, #tpu.dimension_semantics<parallel>, #tpu.dimension_semantics<arbitrary>], iteration_bounds = array<i64: 2, 4, 1, 1>, scalar_prefetch = 0 : i64, scratch_operands = 0 : i64, tpu.core_type = #tpu.core_type<tc>, window_params = [{transform_indices = @transform_0, window_bounds = array<i64: 1, 1, 1, 4, 1, 4, 32>}, {transform_indices = @transform_1, window_bounds = array<i64: 1, 1, 1, 4, 1, 4, 32>}, {transform_indices = @transform_2, window_bounds = array<i64: 1, 1, 1, 4, 1, 4, 32>}, {transform_indices = @transform_3, window_bounds = array<i64: 1, 1, 1, 4, 1, 4, 32>}, {transform_indices = @transform_4, window_bounds = array<i64: 4, 32, 64>}, {transform_indices = @transform_5, window_bounds = array<i64: 1, 64>}, {transform_indices = @transform_6, window_bounds = array<i64: 1, 1, 4, 4, 64>}]} {
    %c0 = arith.constant 0 : index
    %c0_0 = arith.constant 0 : index
    %c0_1 = arith.constant 0 : index
    %c0_2 = arith.constant 0 : index
    %c0_3 = arith.constant 0 : index
    %c0_4 = arith.constant 0 : index
    %c0_5 = arith.constant 0 : index
    %0 = vector.load %arg4[%c0, %c0_0, %c0_1, %c0_2, %c0_3, %c0_4, %c0_5] : memref<1x1x1x4x1x4x32xf32, #tpu.memory_space<vmem>>, vector<1x1x1x4x1x4x32xf32>
    %1 = vector.shape_cast %0 : vector<1x1x1x4x1x4x32xf32> to vector<4x4x32xf32>
    %c0_6 = arith.constant 0 : index
    %c0_7 = arith.constant 0 : index
    %c0_8 = arith.constant 0 : index
    %c0_9 = arith.constant 0 : index
    %c0_10 = arith.constant 0 : index
    %c0_11 = arith.constant 0 : index
    %c0_12 = arith.constant 0 : index
    %2 = vector.load %arg5[%c0_6, %c0_7, %c0_8, %c0_9, %c0_10, %c0_11, %c0_12] : memref<1x1x1x4x1x4x32xf32, #tpu.memory_space<vmem>>, vector<1x1x1x4x1x4x32xf32>
    %3 = vector.shape_cast %2 : vector<1x1x1x4x1x4x32xf32> to vector<4x4x32xf32>
    %c0_13 = arith.constant 0 : index
    %c0_14 = arith.constant 0 : index
    %c0_15 = arith.constant 0 : index
    %c0_16 = arith.constant 0 : index
    %c0_17 = arith.constant 0 : index
    %c0_18 = arith.constant 0 : index
    %c0_19 = arith.constant 0 : index
    %4 = vector.load %arg6[%c0_13, %c0_14, %c0_15, %c0_16, %c0_17, %c0_18, %c0_19] : memref<1x1x1x4x1x4x32xf32, #tpu.memory_space<vmem>>, vector<1x1x1x4x1x4x32xf32>
    %5 = vector.shape_cast %4 : vector<1x1x1x4x1x4x32xf32> to vector<4x4x32xf32>
    %c0_20 = arith.constant 0 : index
    %c0_21 = arith.constant 0 : index
    %c0_22 = arith.constant 0 : index
    %c0_23 = arith.constant 0 : index
    %c0_24 = arith.constant 0 : index
    %c0_25 = arith.constant 0 : index
    %c0_26 = arith.constant 0 : index
    %6 = vector.load %arg7[%c0_20, %c0_21, %c0_22, %c0_23, %c0_24, %c0_25, %c0_26] : memref<1x1x1x4x1x4x32xf32, #tpu.memory_space<vmem>>, vector<1x1x1x4x1x4x32xf32>
    %7 = vector.shape_cast %6 : vector<1x1x1x4x1x4x32xf32> to vector<4x4x32xf32>
    %cst = arith.constant dense<0.000000e+00> : vector<4x4xf32>
    %8 = vector.multi_reduction <add>, %1, %cst [2] : vector<4x4x32xf32> to vector<4x4xf32>
    %9 = vector.shape_cast %8 : vector<4x4xf32> to vector<4x4x1xf32>
    %cst_27 = arith.constant dense<0.000000e+00> : vector<4x4xf32>
    %10 = vector.multi_reduction <add>, %3, %cst_27 [2] : vector<4x4x32xf32> to vector<4x4xf32>
    %11 = vector.shape_cast %10 : vector<4x4xf32> to vector<4x4x1xf32>
    %12 = arith.addf %9, %11 : vector<4x4x1xf32>
    %cst_28 = arith.constant dense<0.000000e+00> : vector<4x4xf32>
    %13 = vector.multi_reduction <add>, %5, %cst_28 [2] : vector<4x4x32xf32> to vector<4x4xf32>
    %14 = vector.shape_cast %13 : vector<4x4xf32> to vector<4x4x1xf32>
    %15 = arith.addf %12, %14 : vector<4x4x1xf32>
    %cst_29 = arith.constant dense<0.000000e+00> : vector<4x4xf32>
    %16 = vector.multi_reduction <add>, %7, %cst_29 [2] : vector<4x4x32xf32> to vector<4x4xf32>
    %17 = vector.shape_cast %16 : vector<4x4xf32> to vector<4x4x1xf32>
    %18 = arith.addf %15, %17 : vector<4x4x1xf32>
    %cst_30 = arith.constant 7.812500e-03 : f32
    %19 = vector.broadcast %cst_30 : f32 to vector<4x4x1xf32>
    %20 = arith.mulf %18, %19 : vector<4x4x1xf32>
    %21 = vector.broadcast %20 : vector<4x4x1xf32> to vector<4x4x32xf32>
    %22 = arith.subf %1, %21 : vector<4x4x32xf32>
    %23 = vector.broadcast %20 : vector<4x4x1xf32> to vector<4x4x32xf32>
    %24 = arith.subf %3, %23 : vector<4x4x32xf32>
    %25 = vector.broadcast %20 : vector<4x4x1xf32> to vector<4x4x32xf32>
    %26 = arith.subf %5, %25 : vector<4x4x32xf32>
    %27 = vector.broadcast %20 : vector<4x4x1xf32> to vector<4x4x32xf32>
    %28 = arith.subf %7, %27 : vector<4x4x32xf32>
    %29 = arith.mulf %22, %22 : vector<4x4x32xf32>
    %cst_31 = arith.constant dense<0.000000e+00> : vector<4x4xf32>
    %30 = vector.multi_reduction <add>, %29, %cst_31 [2] : vector<4x4x32xf32> to vector<4x4xf32>
    %31 = vector.shape_cast %30 : vector<4x4xf32> to vector<4x4x1xf32>
    %32 = arith.mulf %24, %24 : vector<4x4x32xf32>
    %cst_32 = arith.constant dense<0.000000e+00> : vector<4x4xf32>
    %33 = vector.multi_reduction <add>, %32, %cst_32 [2] : vector<4x4x32xf32> to vector<4x4xf32>
    %34 = vector.shape_cast %33 : vector<4x4xf32> to vector<4x4x1xf32>
    %35 = arith.addf %31, %34 : vector<4x4x1xf32>
    %36 = arith.mulf %26, %26 : vector<4x4x32xf32>
    %cst_33 = arith.constant dense<0.000000e+00> : vector<4x4xf32>
    %37 = vector.multi_reduction <add>, %36, %cst_33 [2] : vector<4x4x32xf32> to vector<4x4xf32>
    %38 = vector.shape_cast %37 : vector<4x4xf32> to vector<4x4x1xf32>
    %39 = arith.addf %35, %38 : vector<4x4x1xf32>
    %40 = arith.mulf %28, %28 : vector<4x4x32xf32>
    %cst_34 = arith.constant dense<0.000000e+00> : vector<4x4xf32>
    %41 = vector.multi_reduction <add>, %40, %cst_34 [2] : vector<4x4x32xf32> to vector<4x4xf32>
    %42 = vector.shape_cast %41 : vector<4x4xf32> to vector<4x4x1xf32>
    %43 = arith.addf %39, %42 : vector<4x4x1xf32>
    %cst_35 = arith.constant 7.812500e-03 : f32
    %44 = vector.broadcast %cst_35 : f32 to vector<4x4x1xf32>
    %45 = arith.mulf %43, %44 : vector<4x4x1xf32>
    %cst_36 = arith.constant 9.99999974E-6 : f32
    %46 = vector.broadcast %cst_36 : f32 to vector<4x4x1xf32>
    %47 = arith.addf %45, %46 : vector<4x4x1xf32>
    %48 = math.rsqrt %47 : vector<4x4x1xf32>
    %49 = vector.broadcast %48 : vector<4x4x1xf32> to vector<4x4x32xf32>
    %50 = arith.mulf %22, %49 : vector<4x4x32xf32>
    %51 = arith.truncf %50 : vector<4x4x32xf32> to vector<4x4x32xbf16>
    %52 = vector.broadcast %48 : vector<4x4x1xf32> to vector<4x4x32xf32>
    %53 = arith.mulf %24, %52 : vector<4x4x32xf32>
    %54 = arith.truncf %53 : vector<4x4x32xf32> to vector<4x4x32xbf16>
    %55 = vector.broadcast %48 : vector<4x4x1xf32> to vector<4x4x32xf32>
    %56 = arith.mulf %26, %55 : vector<4x4x32xf32>
    %57 = arith.truncf %56 : vector<4x4x32xf32> to vector<4x4x32xbf16>
    %58 = vector.broadcast %48 : vector<4x4x1xf32> to vector<4x4x32xf32>
    %59 = arith.mulf %28, %58 : vector<4x4x32xf32>
    %60 = arith.truncf %59 : vector<4x4x32xf32> to vector<4x4x32xbf16>
    %c0_37 = arith.constant 0 : index
    %c0_38 = arith.constant 0 : index
    %c0_39 = arith.constant 0 : index
    %61 = vector.load %arg8[%c0_37, %c0_38, %c0_39] : memref<4x32x64xbf16, #tpu.memory_space<vmem>>, vector<4x32x64xbf16>
    %c0_40 = arith.constant 0 : index
    %c0_41 = arith.constant 0 : index
    %62 = vector.load %arg9[%c0_40, %c0_41] : memref<1x64xf32, #tpu.memory_space<vmem>>, vector<1x64xf32>
    %63 = vector.extract_strided_slice %51 {offsets = [0, 0, 0], sizes = [1, 4, 32], strides = [1, 1, 1]} : vector<4x4x32xbf16> to vector<1x4x32xbf16>
    %64 = vector.shape_cast %63 : vector<1x4x32xbf16> to vector<4x32xbf16>
    %65 = vector.extract_strided_slice %61 {offsets = [0, 0, 0], sizes = [1, 32, 64], strides = [1, 1, 1]} : vector<4x32x64xbf16> to vector<1x32x64xbf16>
    %66 = vector.shape_cast %65 : vector<1x32x64xbf16> to vector<32x64xbf16>
    %cst_42 = arith.constant dense<0.000000e+00> : vector<4x64xf32>
    %67 = tpu.matmul %64, %66, %cst_42 {dimension_numbers = #tpu.dot_dimension_numbers<[1], [0], [0], [1], [0, 0, 1, 1], [], []>} : vector<4x32xbf16>, vector<32x64xbf16>, vector<4x64xf32> -> vector<4x64xf32>
    %68 = vector.extract_strided_slice %54 {offsets = [0, 0, 0], sizes = [1, 4, 32], strides = [1, 1, 1]} : vector<4x4x32xbf16> to vector<1x4x32xbf16>
    %69 = vector.shape_cast %68 : vector<1x4x32xbf16> to vector<4x32xbf16>
    %70 = vector.extract_strided_slice %61 {offsets = [1, 0, 0], sizes = [1, 32, 64], strides = [1, 1, 1]} : vector<4x32x64xbf16> to vector<1x32x64xbf16>
    %71 = vector.shape_cast %70 : vector<1x32x64xbf16> to vector<32x64xbf16>
    %cst_43 = arith.constant dense<0.000000e+00> : vector<4x64xf32>
    %72 = tpu.matmul %69, %71, %cst_43 {dimension_numbers = #tpu.dot_dimension_numbers<[1], [0], [0], [1], [0, 0, 1, 1], [], []>} : vector<4x32xbf16>, vector<32x64xbf16>, vector<4x64xf32> -> vector<4x64xf32>
    %73 = arith.addf %67, %72 : vector<4x64xf32>
    %74 = vector.extract_strided_slice %57 {offsets = [0, 0, 0], sizes = [1, 4, 32], strides = [1, 1, 1]} : vector<4x4x32xbf16> to vector<1x4x32xbf16>
    %75 = vector.shape_cast %74 : vector<1x4x32xbf16> to vector<4x32xbf16>
    %76 = vector.extract_strided_slice %61 {offsets = [2, 0, 0], sizes = [1, 32, 64], strides = [1, 1, 1]} : vector<4x32x64xbf16> to vector<1x32x64xbf16>
    %77 = vector.shape_cast %76 : vector<1x32x64xbf16> to vector<32x64xbf16>
    %cst_44 = arith.constant dense<0.000000e+00> : vector<4x64xf32>
    %78 = tpu.matmul %75, %77, %cst_44 {dimension_numbers = #tpu.dot_dimension_numbers<[1], [0], [0], [1], [0, 0, 1, 1], [], []>} : vector<4x32xbf16>, vector<32x64xbf16>, vector<4x64xf32> -> vector<4x64xf32>
    %79 = arith.addf %73, %78 : vector<4x64xf32>
    %80 = vector.extract_strided_slice %60 {offsets = [0, 0, 0], sizes = [1, 4, 32], strides = [1, 1, 1]} : vector<4x4x32xbf16> to vector<1x4x32xbf16>
    %81 = vector.shape_cast %80 : vector<1x4x32xbf16> to vector<4x32xbf16>
    %82 = vector.extract_strided_slice %61 {offsets = [3, 0, 0], sizes = [1, 32, 64], strides = [1, 1, 1]} : vector<4x32x64xbf16> to vector<1x32x64xbf16>
    %83 = vector.shape_cast %82 : vector<1x32x64xbf16> to vector<32x64xbf16>
    %cst_45 = arith.constant dense<0.000000e+00> : vector<4x64xf32>
    %84 = tpu.matmul %81, %83, %cst_45 {dimension_numbers = #tpu.dot_dimension_numbers<[1], [0], [0], [1], [0, 0, 1, 1], [], []>} : vector<4x32xbf16>, vector<32x64xbf16>, vector<4x64xf32> -> vector<4x64xf32>
    %85 = arith.addf %79, %84 : vector<4x64xf32>
    %86 = vector.broadcast %62 : vector<1x64xf32> to vector<4x64xf32>
    %87 = arith.addf %85, %86 : vector<4x64xf32>
    %c0_46 = arith.constant 0 : index
    %c0_47 = arith.constant 0 : index
    %c0_48 = arith.constant 0 : index
    %c0_49 = arith.constant 0 : index
    %c0_50 = arith.constant 0 : index
    %88 = vector.load %arg10[%c0_46, %c0_47, %c0_48, %c0_49, %c0_50] : memref<1x1x4x4x64xf32, #tpu.memory_space<vmem>>, vector<1x1x1x4x64xf32>
    %89 = vector.shape_cast %88 : vector<1x1x1x4x64xf32> to vector<4x64xf32>
    %90 = vector.shape_cast %87 : vector<4x64xf32> to vector<1x1x1x4x64xf32>
    tpu.vector_store %arg10[%c0_46, %c0_47, %c0_48, %c0_49, %c0_50], %90 {strides = array<i32>} : memref<1x1x4x4x64xf32, #tpu.memory_space<vmem>>, vector<1x1x1x4x64xf32>,
    %91 = vector.extract_strided_slice %51 {offsets = [1, 0, 0], sizes = [1, 4, 32], strides = [1, 1, 1]} : vector<4x4x32xbf16> to vector<1x4x32xbf16>
    %92 = vector.shape_cast %91 : vector<1x4x32xbf16> to vector<4x32xbf16>
    %93 = vector.extract_strided_slice %61 {offsets = [0, 0, 0], sizes = [1, 32, 64], strides = [1, 1, 1]} : vector<4x32x64xbf16> to vector<1x32x64xbf16>
    %94 = vector.shape_cast %93 : vector<1x32x64xbf16> to vector<32x64xbf16>
    %cst_51 = arith.constant dense<0.000000e+00> : vector<4x64xf32>
    %95 = tpu.matmul %92, %94, %cst_51 {dimension_numbers = #tpu.dot_dimension_numbers<[1], [0], [0], [1], [0, 0, 1, 1], [], []>} : vector<4x32xbf16>, vector<32x64xbf16>, vector<4x64xf32> -> vector<4x64xf32>
    %96 = vector.extract_strided_slice %54 {offsets = [1, 0, 0], sizes = [1, 4, 32], strides = [1, 1, 1]} : vector<4x4x32xbf16> to vector<1x4x32xbf16>
    %97 = vector.shape_cast %96 : vector<1x4x32xbf16> to vector<4x32xbf16>
    %98 = vector.extract_strided_slice %61 {offsets = [1, 0, 0], sizes = [1, 32, 64], strides = [1, 1, 1]} : vector<4x32x64xbf16> to vector<1x32x64xbf16>
    %99 = vector.shape_cast %98 : vector<1x32x64xbf16> to vector<32x64xbf16>
    %cst_52 = arith.constant dense<0.000000e+00> : vector<4x64xf32>
    %100 = tpu.matmul %97, %99, %cst_52 {dimension_numbers = #tpu.dot_dimension_numbers<[1], [0], [0], [1], [0, 0, 1, 1], [], []>} : vector<4x32xbf16>, vector<32x64xbf16>, vector<4x64xf32> -> vector<4x64xf32>
    %101 = arith.addf %95, %100 : vector<4x64xf32>
    %102 = vector.extract_strided_slice %57 {offsets = [1, 0, 0], sizes = [1, 4, 32], strides = [1, 1, 1]} : vector<4x4x32xbf16> to vector<1x4x32xbf16>
    %103 = vector.shape_cast %102 : vector<1x4x32xbf16> to vector<4x32xbf16>
    %104 = vector.extract_strided_slice %61 {offsets = [2, 0, 0], sizes = [1, 32, 64], strides = [1, 1, 1]} : vector<4x32x64xbf16> to vector<1x32x64xbf16>
    %105 = vector.shape_cast %104 : vector<1x32x64xbf16> to vector<32x64xbf16>
    %cst_53 = arith.constant dense<0.000000e+00> : vector<4x64xf32>
    %106 = tpu.matmul %103, %105, %cst_53 {dimension_numbers = #tpu.dot_dimension_numbers<[1], [0], [0], [1], [0, 0, 1, 1], [], []>} : vector<4x32xbf16>, vector<32x64xbf16>, vector<4x64xf32> -> vector<4x64xf32>
    %107 = arith.addf %101, %106 : vector<4x64xf32>
    %108 = vector.extract_strided_slice %60 {offsets = [1, 0, 0], sizes = [1, 4, 32], strides = [1, 1, 1]} : vector<4x4x32xbf16> to vector<1x4x32xbf16>
    %109 = vector.shape_cast %108 : vector<1x4x32xbf16> to vector<4x32xbf16>
    %110 = vector.extract_strided_slice %61 {offsets = [3, 0, 0], sizes = [1, 32, 64], strides = [1, 1, 1]} : vector<4x32x64xbf16> to vector<1x32x64xbf16>
    %111 = vector.shape_cast %110 : vector<1x32x64xbf16> to vector<32x64xbf16>
    %cst_54 = arith.constant dense<0.000000e+00> : vector<4x64xf32>
    %112 = tpu.matmul %109, %111, %cst_54 {dimension_numbers = #tpu.dot_dimension_numbers<[1], [0], [0], [1], [0, 0, 1, 1], [], []>} : vector<4x32xbf16>, vector<32x64xbf16>, vector<4x64xf32> -> vector<4x64xf32>
    %113 = arith.addf %107, %112 : vector<4x64xf32>
    %114 = vector.broadcast %62 : vector<1x64xf32> to vector<4x64xf32>
    %115 = arith.addf %113, %114 : vector<4x64xf32>
    %c0_55 = arith.constant 0 : index
    %c0_56 = arith.constant 0 : index
    %c1 = arith.constant 1 : index
    %c0_57 = arith.constant 0 : index
    %c0_58 = arith.constant 0 : index
    %116 = vector.load %arg10[%c0_55, %c0_56, %c1, %c0_57, %c0_58] : memref<1x1x4x4x64xf32, #tpu.memory_space<vmem>>, vector<1x1x1x4x64xf32>
    %117 = vector.shape_cast %116 : vector<1x1x1x4x64xf32> to vector<4x64xf32>
    %118 = vector.shape_cast %115 : vector<4x64xf32> to vector<1x1x1x4x64xf32>
    tpu.vector_store %arg10[%c0_55, %c0_56, %c1, %c0_57, %c0_58], %118 {strides = array<i32>} : memref<1x1x4x4x64xf32, #tpu.memory_space<vmem>>, vector<1x1x1x4x64xf32>,
    %119 = vector.extract_strided_slice %51 {offsets = [2, 0, 0], sizes = [1, 4, 32], strides = [1, 1, 1]} : vector<4x4x32xbf16> to vector<1x4x32xbf16>
    %120 = vector.shape_cast %119 : vector<1x4x32xbf16> to vector<4x32xbf16>
    %121 = vector.extract_strided_slice %61 {offsets = [0, 0, 0], sizes = [1, 32, 64], strides = [1, 1, 1]} : vector<4x32x64xbf16> to vector<1x32x64xbf16>
    %122 = vector.shape_cast %121 : vector<1x32x64xbf16> to vector<32x64xbf16>
    %cst_59 = arith.constant dense<0.000000e+00> : vector<4x64xf32>
    %123 = tpu.matmul %120, %122, %cst_59 {dimension_numbers = #tpu.dot_dimension_numbers<[1], [0], [0], [1], [0, 0, 1, 1], [], []>} : vector<4x32xbf16>, vector<32x64xbf16>, vector<4x64xf32> -> vector<4x64xf32>
    %124 = vector.extract_strided_slice %54 {offsets = [2, 0, 0], sizes = [1, 4, 32], strides = [1, 1, 1]} : vector<4x4x32xbf16> to vector<1x4x32xbf16>
    %125 = vector.shape_cast %124 : vector<1x4x32xbf16> to vector<4x32xbf16>
    %126 = vector.extract_strided_slice %61 {offsets = [1, 0, 0], sizes = [1, 32, 64], strides = [1, 1, 1]} : vector<4x32x64xbf16> to vector<1x32x64xbf16>
    %127 = vector.shape_cast %126 : vector<1x32x64xbf16> to vector<32x64xbf16>
    %cst_60 = arith.constant dense<0.000000e+00> : vector<4x64xf32>
    %128 = tpu.matmul %125, %127, %cst_60 {dimension_numbers = #tpu.dot_dimension_numbers<[1], [0], [0], [1], [0, 0, 1, 1], [], []>} : vector<4x32xbf16>, vector<32x64xbf16>, vector<4x64xf32> -> vector<4x64xf32>
    %129 = arith.addf %123, %128 : vector<4x64xf32>
    %130 = vector.extract_strided_slice %57 {offsets = [2, 0, 0], sizes = [1, 4, 32], strides = [1, 1, 1]} : vector<4x4x32xbf16> to vector<1x4x32xbf16>
    %131 = vector.shape_cast %130 : vector<1x4x32xbf16> to vector<4x32xbf16>
    %132 = vector.extract_strided_slice %61 {offsets = [2, 0, 0], sizes = [1, 32, 64], strides = [1, 1, 1]} : vector<4x32x64xbf16> to vector<1x32x64xbf16>
    %133 = vector.shape_cast %132 : vector<1x32x64xbf16> to vector<32x64xbf16>
    %cst_61 = arith.constant dense<0.000000e+00> : vector<4x64xf32>
    %134 = tpu.matmul %131, %133, %cst_61 {dimension_numbers = #tpu.dot_dimension_numbers<[1], [0], [0], [1], [0, 0, 1, 1], [], []>} : vector<4x32xbf16>, vector<32x64xbf16>, vector<4x64xf32> -> vector<4x64xf32>
    %135 = arith.addf %129, %134 : vector<4x64xf32>
    %136 = vector.extract_strided_slice %60 {offsets = [2, 0, 0], sizes = [1, 4, 32], strides = [1, 1, 1]} : vector<4x4x32xbf16> to vector<1x4x32xbf16>
    %137 = vector.shape_cast %136 : vector<1x4x32xbf16> to vector<4x32xbf16>
    %138 = vector.extract_strided_slice %61 {offsets = [3, 0, 0], sizes = [1, 32, 64], strides = [1, 1, 1]} : vector<4x32x64xbf16> to vector<1x32x64xbf16>
    %139 = vector.shape_cast %138 : vector<1x32x64xbf16> to vector<32x64xbf16>
    %cst_62 = arith.constant dense<0.000000e+00> : vector<4x64xf32>
    %140 = tpu.matmul %137, %139, %cst_62 {dimension_numbers = #tpu.dot_dimension_numbers<[1], [0], [0], [1], [0, 0, 1, 1], [], []>} : vector<4x32xbf16>, vector<32x64xbf16>, vector<4x64xf32> -> vector<4x64xf32>
    %141 = arith.addf %135, %140 : vector<4x64xf32>
    %142 = vector.broadcast %62 : vector<1x64xf32> to vector<4x64xf32>
    %143 = arith.addf %141, %142 : vector<4x64xf32>
    %c0_63 = arith.constant 0 : index
    %c0_64 = arith.constant 0 : index
    %c2 = arith.constant 2 : index
    %c0_65 = arith.constant 0 : index
    %c0_66 = arith.constant 0 : index
    %144 = vector.load %arg10[%c0_63, %c0_64, %c2, %c0_65, %c0_66] : memref<1x1x4x4x64xf32, #tpu.memory_space<vmem>>, vector<1x1x1x4x64xf32>
    %145 = vector.shape_cast %144 : vector<1x1x1x4x64xf32> to vector<4x64xf32>
    %146 = vector.shape_cast %143 : vector<4x64xf32> to vector<1x1x1x4x64xf32>
    tpu.vector_store %arg10[%c0_63, %c0_64, %c2, %c0_65, %c0_66], %146 {strides = array<i32>} : memref<1x1x4x4x64xf32, #tpu.memory_space<vmem>>, vector<1x1x1x4x64xf32>,
    %147 = vector.extract_strided_slice %51 {offsets = [3, 0, 0], sizes = [1, 4, 32], strides = [1, 1, 1]} : vector<4x4x32xbf16> to vector<1x4x32xbf16>
    %148 = vector.shape_cast %147 : vector<1x4x32xbf16> to vector<4x32xbf16>
    %149 = vector.extract_strided_slice %61 {offsets = [0, 0, 0], sizes = [1, 32, 64], strides = [1, 1, 1]} : vector<4x32x64xbf16> to vector<1x32x64xbf16>
    %150 = vector.shape_cast %149 : vector<1x32x64xbf16> to vector<32x64xbf16>
    %cst_67 = arith.constant dense<0.000000e+00> : vector<4x64xf32>
    %151 = tpu.matmul %148, %150, %cst_67 {dimension_numbers = #tpu.dot_dimension_numbers<[1], [0], [0], [1], [0, 0, 1, 1], [], []>} : vector<4x32xbf16>, vector<32x64xbf16>, vector<4x64xf32> -> vector<4x64xf32>
    %152 = vector.extract_strided_slice %54 {offsets = [3, 0, 0], sizes = [1, 4, 32], strides = [1, 1, 1]} : vector<4x4x32xbf16> to vector<1x4x32xbf16>
    %153 = vector.shape_cast %152 : vector<1x4x32xbf16> to vector<4x32xbf16>
    %154 = vector.extract_strided_slice %61 {offsets = [1, 0, 0], sizes = [1, 32, 64], strides = [1, 1, 1]} : vector<4x32x64xbf16> to vector<1x32x64xbf16>
    %155 = vector.shape_cast %154 : vector<1x32x64xbf16> to vector<32x64xbf16>
    %cst_68 = arith.constant dense<0.000000e+00> : vector<4x64xf32>
    %156 = tpu.matmul %153, %155, %cst_68 {dimension_numbers = #tpu.dot_dimension_numbers<[1], [0], [0], [1], [0, 0, 1, 1], [], []>} : vector<4x32xbf16>, vector<32x64xbf16>, vector<4x64xf32> -> vector<4x64xf32>
    %157 = arith.addf %151, %156 : vector<4x64xf32>
    %158 = vector.extract_strided_slice %57 {offsets = [3, 0, 0], sizes = [1, 4, 32], strides = [1, 1, 1]} : vector<4x4x32xbf16> to vector<1x4x32xbf16>
    %159 = vector.shape_cast %158 : vector<1x4x32xbf16> to vector<4x32xbf16>
    %160 = vector.extract_strided_slice %61 {offsets = [2, 0, 0], sizes = [1, 32, 64], strides = [1, 1, 1]} : vector<4x32x64xbf16> to vector<1x32x64xbf16>
    %161 = vector.shape_cast %160 : vector<1x32x64xbf16> to vector<32x64xbf16>
    %cst_69 = arith.constant dense<0.000000e+00> : vector<4x64xf32>
    %162 = tpu.matmul %159, %161, %cst_69 {dimension_numbers = #tpu.dot_dimension_numbers<[1], [0], [0], [1], [0, 0, 1, 1], [], []>} : vector<4x32xbf16>, vector<32x64xbf16>, vector<4x64xf32> -> vector<4x64xf32>
    %163 = arith.addf %157, %162 : vector<4x64xf32>
    %164 = vector.extract_strided_slice %60 {offsets = [3, 0, 0], sizes = [1, 4, 32], strides = [1, 1, 1]} : vector<4x4x32xbf16> to vector<1x4x32xbf16>
    %165 = vector.shape_cast %164 : vector<1x4x32xbf16> to vector<4x32xbf16>
    %166 = vector.extract_strided_slice %61 {offsets = [3, 0, 0], sizes = [1, 32, 64], strides = [1, 1, 1]} : vector<4x32x64xbf16> to vector<1x32x64xbf16>
    %167 = vector.shape_cast %166 : vector<1x32x64xbf16> to vector<32x64xbf16>
    %cst_70 = arith.constant dense<0.000000e+00> : vector<4x64xf32>
    %168 = tpu.matmul %165, %167, %cst_70 {dimension_numbers = #tpu.dot_dimension_numbers<[1], [0], [0], [1], [0, 0, 1, 1], [], []>} : vector<4x32xbf16>, vector<32x64xbf16>, vector<4x64xf32> -> vector<4x64xf32>
    %169 = arith.addf %163, %168 : vector<4x64xf32>
    %170 = vector.broadcast %62 : vector<1x64xf32> to vector<4x64xf32>
    %171 = arith.addf %169, %170 : vector<4x64xf32>
    %c0_71 = arith.constant 0 : index
    %c0_72 = arith.constant 0 : index
    %c3 = arith.constant 3 : index
    %c0_73 = arith.constant 0 : index
    %c0_74 = arith.constant 0 : index
    %172 = vector.load %arg10[%c0_71, %c0_72, %c3, %c0_73, %c0_74] : memref<1x1x4x4x64xf32, #tpu.memory_space<vmem>>, vector<1x1x1x4x64xf32>
    %173 = vector.shape_cast %172 : vector<1x1x1x4x64xf32> to vector<4x64xf32>
    %174 = vector.shape_cast %171 : vector<4x64xf32> to vector<1x1x1x4x64xf32>
    tpu.vector_store %arg10[%c0_71, %c0_72, %c3, %c0_73, %c0_74], %174 {strides = array<i32>} : memref<1x1x4x4x64xf32, #tpu.memory_space<vmem>>, vector<1x1x1x4x64xf32>,
    return
  }
  func.func @transform_0(%arg0: i32, %arg1: i32, %arg2: i32, %arg3: i32) -> (i32, i32, i32, i32, i32, i32, i32) {
    %c0_i32 = arith.constant 0 : i32
    %c0_i32_0 = arith.constant 0 : i32
    %c0_i32_1 = arith.constant 0 : i32
    %c0_i32_2 = arith.constant 0 : i32
    %c0_i32_3 = arith.constant 0 : i32
    return %arg0, %arg1, %c0_i32, %arg2, %c0_i32_0, %c0_i32_1, %c0_i32_2 : i32, i32, i32, i32, i32, i32, i32
  }
  func.func @transform_1(%arg0: i32, %arg1: i32, %arg2: i32, %arg3: i32) -> (i32, i32, i32, i32, i32, i32, i32) {
    %c0_i32 = arith.constant 0 : i32
    %c1_i32 = arith.constant 1 : i32
    %c0_i32_0 = arith.constant 0 : i32
    %c0_i32_1 = arith.constant 0 : i32
    %c0_i32_2 = arith.constant 0 : i32
    return %arg0, %arg1, %c0_i32, %arg2, %c1_i32, %c0_i32_0, %c0_i32_1 : i32, i32, i32, i32, i32, i32, i32
  }
  func.func @transform_2(%arg0: i32, %arg1: i32, %arg2: i32, %arg3: i32) -> (i32, i32, i32, i32, i32, i32, i32) {
    %c1_i32 = arith.constant 1 : i32
    %c0_i32 = arith.constant 0 : i32
    %c0_i32_0 = arith.constant 0 : i32
    %c0_i32_1 = arith.constant 0 : i32
    %c0_i32_2 = arith.constant 0 : i32
    return %arg0, %arg1, %c1_i32, %arg2, %c0_i32, %c0_i32_0, %c0_i32_1 : i32, i32, i32, i32, i32, i32, i32
  }
  func.func @transform_3(%arg0: i32, %arg1: i32, %arg2: i32, %arg3: i32) -> (i32, i32, i32, i32, i32, i32, i32) {
    %c1_i32 = arith.constant 1 : i32
    %c1_i32_0 = arith.constant 1 : i32
    %c0_i32 = arith.constant 0 : i32
    %c0_i32_1 = arith.constant 0 : i32
    %c0_i32_2 = arith.constant 0 : i32
    return %arg0, %arg1, %c1_i32, %arg2, %c1_i32_0, %c0_i32, %c0_i32_1 : i32, i32, i32, i32, i32, i32, i32
  }
  func.func @transform_4(%arg0: i32, %arg1: i32, %arg2: i32, %arg3: i32) -> (i32, i32, i32) {
    %c0_i32 = arith.constant 0 : i32
    %c0_i32_0 = arith.constant 0 : i32
    %c0_i32_1 = arith.constant 0 : i32
    return %c0_i32, %c0_i32_0, %arg3 : i32, i32, i32
  }
  func.func @transform_5(%arg0: i32, %arg1: i32, %arg2: i32, %arg3: i32) -> (i32, i32) {
    %c0_i32 = arith.constant 0 : i32
    %c0_i32_0 = arith.constant 0 : i32
    return %c0_i32, %arg3 : i32, i32
  }
  func.func @transform_6(%arg0: i32, %arg1: i32, %arg2: i32, %arg3: i32) -> (i32, i32, i32, i32, i32) {
    %c0_i32 = arith.constant 0 : i32
    %c0_i32_0 = arith.constant 0 : i32
    return %arg0, %arg1, %arg2, %c0_i32, %arg3 : i32, i32, i32, i32, i32
  }
}

</mosaic_0001>

<llo_original>
// kernel: _lambda_.1
$region0: #{_lambda_.1}
  #allocation0 [shape = 'u32[]', space=smem, size = 0x4, offset = 0x4, fixed_abs, tag = 'smem constant byte address 0x4 - core index']
  #allocation1 [shape = 'u32[144,128]{1,0:T(1,128)}', space=vmem, size = 0x12000, scoped, tag = 'internal scratch']
  %s0 = inlined_call_operand.vmem [shape: f32[2,4,2,4,2,4,32], index: 0, kind: input, shape index: {}, may-alias: {0,1,2,3}]
  %s1 = inlined_call_operand.vmem [shape: f32[2,4,2,4,2,4,32], index: 1, kind: input, shape index: {}, may-alias: {0,1,2,3}]
  %s2 = inlined_call_operand.vmem [shape: f32[2,4,2,4,2,4,32], index: 2, kind: input, shape index: {}, may-alias: {0,1,2,3}]
  %s3 = inlined_call_operand.vmem [shape: f32[2,4,2,4,2,4,32], index: 3, kind: input, shape index: {}, may-alias: {0,1,2,3}]
  %s4 = inlined_call_operand.vmem [shape: bf16[4,32,64], index: 4, kind: input, shape index: {}]
  %s5 = inlined_call_operand.vmem [shape: f32[1,64], index: 5, kind: input, shape index: {}]
  %s6 = inlined_call_operand.hbm [shape: f32[2,4,4,4,64], index: 6, kind: output, shape index: {}]
  %s7 = sld [smem:[#allocation0]]
  $region221: #{_lambda_.1} parent=0
    _
  %s9 = ssub.s32 1, %s7
  %s10 = scalar_select 0, %s9, %s7
  $region1: #{_lambda_.1} parent=0
    #allocation2 [shape = 'u8[16384]{0}', space=vmem, size = 0x4000, scoped, tag = 'input window, operand 0']
    #allocation3 [shape = 'u8[16384]{0}', space=vmem, size = 0x4000, scoped, tag = 'input window, operand 1']
    #allocation4 [shape = 'u8[16384]{0}', space=vmem, size = 0x4000, scoped, tag = 'input window, operand 2']
    #allocation5 [shape = 'u8[16384]{0}', space=vmem, size = 0x4000, scoped, tag = 'input window, operand 3']
    #allocation6 [shape = 'u8[16384]{0}', space=vmem, size = 0x4000, scoped, tag = 'output window, operand 0']
    #allocation7 [shape = 's32[2]{0}', space=sflag, size = 0x8, scoped, tag = 'scoped memory for _lambda_.1']
    %11 = vsyncpa [#allocation7], 0
    %s12 = scalar_lea.sflag [#allocation7], 1
    %13 = vsyncpa %s12, 0
    loop: start=0, step=1, limit=10
    $region2: #{_lambda_.1} parent=1 // loop_pre_header
      _
    $region3: #{_lambda_.1} parent=1 // loop_header
      %s15 = sphi 0, %s19
      %p16 = scmp.ge.s32.totalorder %s15, 10
      %s22 = sphi 0, %s48
      %s23 = sphi 0, %s44
      %s24 = sphi 0, %s40
      %s25 = sphi 0, %s36
      %s26 = sphi 0, %s22
      %s27 = sphi 0, %s23
      %s28 = sphi 0, %s24
      %s29 = sphi 0, %s25
      %s30 = sphi 0, %s26
      %s31 = sphi 0, %s27
      %s32 = sphi 0, %s28
      %s33 = sphi 0, %s29
      %s55 = sphi 0, %s57
      %s58 = sphi 0, %s55
      %s59 = sphi 0, %s58
      %s75 = sphi 0, %s59
      %s85 = sphi 0, %s87
      %s88 = sphi 0, %s85
      %s89 = sphi 0, %s88
      %s105 = sphi 0, %s89
      %s115 = sphi 0, %s117
      %s118 = sphi 0, %s115
      %s119 = sphi 0, %s118
      %s135 = sphi 0, %s119
      %s145 = sphi 0, %s147
      %s148 = sphi 0, %s145
      %s149 = sphi 0, %s148
      %s165 = sphi 0, %s149
      %s171 = sphi 0, %s173
      %s174 = sphi 0, %s171
      %s175 = sphi 0, %s174
      %s191 = sphi 0, %s175
      %s197 = sphi 0, %s199
      %s200 = sphi 0, %s197
      %s201 = sphi 0, %s200
      %s217 = sphi 0, %s201
      %s229 = sphi 0, %s231
      %s232 = sphi 0, %s229
      %s233 = sphi 0, %s232
      %s249 = sphi 0, %s233
    $region4: #{_lambda_.1} parent=1 // loop_header_branch
      %18 = sbr.rel (%p16) target = $region8
    $region5: #{_lambda_.1} parent=1 // loop_body
      %s20 = ssub.s32 %s15, 1
      %s21 = ssub.s32 %s15, 2
      %s34 = sadd.s32 1, %s25
      %p35 = scmp.ge.s32.totalorder %s34, 1
      %s36 = scalar_select %p35, 0, %s34
      %s37 = sadd.s32 1, %s24
      %s38 = scalar_select %p35, %s37, %s24
      %p39 = scmp.ge.s32.totalorder %s38, 1
      %s40 = scalar_select %p39, 0, %s38
      %s41 = sadd.s32 1, %s23
      %s42 = scalar_select %p39, %s41, %s23
      %p43 = scmp.ge.s32.totalorder %s42, 4
      %s44 = scalar_select %p43, 0, %s42
      %s45 = sadd.s32 1, %s22
      %s46 = scalar_select %p43, %s45, %s22
      %p47 = scmp.ge.s32.totalorder %s46, 2
      %s48 = scalar_select %p47, 0, %s46
      %s49 = ssub.s32 %s22, %s48
      %s50 = ssub.s32 %s23, %s44
      %s51 = sor.u32 %s49, %s50
      %s52 = ssub.s32 %s24, %s40
      %s53 = sor.u32 %s51, %s52
      %p54 = scmp.eq.s32.totalorder %s53, 0
      %s56 = sadd.s32 %s55, 1
      %s57 = scalar_select %p54, %s55, %s56
      %p60 = pneg %p54
      %p61 = scmp.eq.s32.totalorder %s15, 7
      %p62 = por %p60, %p61
      %p63 = scmp.ne.s32.totalorder %s55, %s58
      %p64 = scmp.eq.s32.totalorder %s15, 0
      %p65 = por %p63, %p64
      %p66 = scmp.ne.s32.totalorder %s55, %s58
      %p67 = scmp.eq.s32.totalorder %s20, 7
      %p68 = por %p66, %p67
      %p69 = scmp.ne.s32.totalorder %s58, %s59
      %p70 = scmp.eq.s32.totalorder %s20, 0
      %p71 = por %p69, %p70
      %p72 = scmp.ne.s32.totalorder %s58, %s59
      %p73 = scmp.eq.s32.totalorder %s21, 7
      %p74 = por %p72, %p73
      %p76 = scmp.ne.s32.totalorder %s59, %s75
      %p77 = scmp.eq.s32.totalorder %s21, 0
      %p78 = por %p76, %p77
      %s79 = ssub.s32 %s22, %s48
      %s80 = ssub.s32 %s23, %s44
      %s81 = sor.u32 %s79, %s80
      %s82 = ssub.s32 %s24, %s40
      %s83 = sor.u32 %s81, %s82
      %p84 = scmp.eq.s32.totalorder %s83, 0
      %s86 = sadd.s32 %s85, 1
      %s87 = scalar_select %p84, %s85, %s86
      %p90 = pneg %p84
      %p91 = scmp.eq.s32.totalorder %s15, 7
      %p92 = por %p90, %p91
      %p93 = scmp.ne.s32.totalorder %s85, %s88
      %p94 = scmp.eq.s32.totalorder %s15, 0
      %p95 = por %p93, %p94
      %p96 = scmp.ne.s32.totalorder %s85, %s88
      %p97 = scmp.eq.s32.totalorder %s20, 7
      %p98 = por %p96, %p97
      %p99 = scmp.ne.s32.totalorder %s88, %s89
      %p100 = scmp.eq.s32.totalorder %s20, 0
      %p101 = por %p99, %p100
      %p102 = scmp.ne.s32.totalorder %s88, %s89
      %p103 = scmp.eq.s32.totalorder %s21, 7
      %p104 = por %p102, %p103
      %p106 = scmp.ne.s32.totalorder %s89, %s105
      %p107 = scmp.eq.s32.totalorder %s21, 0
      %p108 = por %p106, %p107
      %s109 = ssub.s32 %s22, %s48
      %s110 = ssub.s32 %s23, %s44
      %s111 = sor.u32 %s109, %s110
      %s112 = ssub.s32 %s24, %s40
      %s113 = sor.u32 %s111, %s112
      %p114 = scmp.eq.s32.totalorder %s113, 0
      %s116 = sadd.s32 %s115, 1
      %s117 = scalar_select %p114, %s115, %s116
      %p120 = pneg %p114
      %p121 = scmp.eq.s32.totalorder %s15, 7
      %p122 = por %p120, %p121
      %p123 = scmp.ne.s32.totalorder %s115, %s118
      %p124 = scmp.eq.s32.totalorder %s15, 0
      %p125 = por %p123, %p124
      %p126 = scmp.ne.s32.totalorder %s115, %s118
      %p127 = scmp.eq.s32.totalorder %s20, 7
      %p128 = por %p126, %p127
      %p129 = scmp.ne.s32.totalorder %s118, %s119
      %p130 = scmp.eq.s32.totalorder %s20, 0
      %p131 = por %p129, %p130
      %p132 = scmp.ne.s32.totalorder %s118, %s119
      %p133 = scmp.eq.s32.totalorder %s21, 7
      %p134 = por %p132, %p133
      %p136 = scmp.ne.s32.totalorder %s119, %s135
      %p137 = scmp.eq.s32.totalorder %s21, 0
      %p138 = por %p136, %p137
      %s139 = ssub.s32 %s22, %s48
      %s140 = ssub.s32 %s23, %s44
      %s141 = sor.u32 %s139, %s140
      %s142 = ssub.s32 %s24, %s40
      %s143 = sor.u32 %s141, %s142
      %p144 = scmp.eq.s32.totalorder %s143, 0
      %s146 = sadd.s32 %s145, 1
      %s147 = scalar_select %p144, %s145, %s146
      %p150 = pneg %p144
      %p151 = scmp.eq.s32.totalorder %s15, 7
      %p152 = por %p150, %p151
      %p153 = scmp.ne.s32.totalorder %s145, %s148
      %p154 = scmp.eq.s32.totalorder %s15, 0
      %p155 = por %p153, %p154
      %p156 = scmp.ne.s32.totalorder %s145, %s148
      %p157 = scmp.eq.s32.totalorder %s20, 7
      %p158 = por %p156, %p157
      %p159 = scmp.ne.s32.totalorder %s148, %s149
      %p160 = scmp.eq.s32.totalorder %s20, 0
      %p161 = por %p159, %p160
      %p162 = scmp.ne.s32.totalorder %s148, %s149
      %p163 = scmp.eq.s32.totalorder %s21, 7
      %p164 = por %p162, %p163
      %p166 = scmp.ne.s32.totalorder %s149, %s165
      %p167 = scmp.eq.s32.totalorder %s21, 0
      %p168 = por %p166, %p167
      %s169 = ssub.s32 %s25, %s36
      %p170 = scmp.eq.s32.totalorder %s169, 0
      %s172 = sadd.s32 %s171, 1
      %s173 = scalar_select %p170, %s171, %s172
      %p176 = pneg %p170
      %p177 = scmp.eq.s32.totalorder %s15, 7
      %p178 = por %p176, %p177
      %p179 = scmp.ne.s32.totalorder %s171, %s174
      %p180 = scmp.eq.s32.totalorder %s15, 0
      %p181 = por %p179, %p180
      %p182 = scmp.ne.s32.totalorder %s171, %s174
      %p183 = scmp.eq.s32.totalorder %s20, 7
      %p184 = por %p182, %p183
      %p185 = scmp.ne.s32.totalorder %s174, %s175
      %p186 = scmp.eq.s32.totalorder %s20, 0
      %p187 = por %p185, %p186
      %p188 = scmp.ne.s32.totalorder %s174, %s175
      %p189 = scmp.eq.s32.totalorder %s21, 7
      %p190 = por %p188, %p189
      %p192 = scmp.ne.s32.totalorder %s175, %s191
      %p193 = scmp.eq.s32.totalorder %s21, 0
      %p194 = por %p192, %p193
      %s195 = ssub.s32 %s25, %s36
      %p196 = scmp.eq.s32.totalorder %s195, 0
      %s198 = sadd.s32 %s197, 1
      %s199 = scalar_select %p196, %s197, %s198
      %p202 = pneg %p196
      %p203 = scmp.eq.s32.totalorder %s15, 7
      %p204 = por %p202, %p203
      %p205 = scmp.ne.s32.totalorder %s197, %s200
      %p206 = scmp.eq.s32.totalorder %s15, 0
      %p207 = por %p205, %p206
      %p208 = scmp.ne.s32.totalorder %s197, %s200
      %p209 = scmp.eq.s32.totalorder %s20, 7
      %p210 = por %p208, %p209
      %p211 = scmp.ne.s32.totalorder %s200, %s201
      %p212 = scmp.eq.s32.totalorder %s20, 0
      %p213 = por %p211, %p212
      %p214 = scmp.ne.s32.totalorder %s200, %s201
      %p215 = scmp.eq.s32.totalorder %s21, 7
      %p216 = por %p214, %p215
      %p218 = scmp.ne.s32.totalorder %s201, %s217
      %p219 = scmp.eq.s32.totalorder %s21, 0
      %p220 = por %p218, %p219
      %s221 = ssub.s32 %s22, %s48
      %s222 = ssub.s32 %s23, %s44
      %s223 = sor.u32 %s221, %s222
      %s224 = ssub.s32 %s24, %s40
      %s225 = sor.u32 %s223, %s224
      %s226 = ssub.s32 %s25, %s36
      %s227 = sor.u32 %s225, %s226
      %p228 = scmp.eq.s32.totalorder %s227, 0
      %s230 = sadd.s32 %s229, 1
      %s231 = scalar_select %p228, %s229, %s230
      %p234 = pneg %p228
      %p235 = scmp.eq.s32.totalorder %s15, 7
      %p236 = por %p234, %p235
      %p237 = scmp.ne.s32.totalorder %s229, %s232
      %p238 = scmp.eq.s32.totalorder %s15, 0
      %p239 = por %p237, %p238
      %p240 = scmp.ne.s32.totalorder %s229, %s232
      %p241 = scmp.eq.s32.totalorder %s20, 7
      %p242 = por %p240, %p241
      %p243 = scmp.ne.s32.totalorder %s232, %s233
      %p244 = scmp.eq.s32.totalorder %s20, 0
      %p245 = por %p243, %p244
      %p246 = scmp.ne.s32.totalorder %s232, %s233
      %p247 = scmp.eq.s32.totalorder %s21, 7
      %p248 = por %p246, %p247
      %p250 = scmp.ne.s32.totalorder %s233, %s249
      %p251 = scmp.eq.s32.totalorder %s21, 0
      %p252 = por %p250, %p251
      %p253 = scmp.le.s32.totalorder 1, %s15
      %p254 = scmp.lt.s32.totalorder %s15, 9
      %p255 = pnand %p253, %p254
      %p256 = pneg %p255
      // Predicated region
      $region9: #{_lambda_.1} parent=5 // pred_check
        _
      $region10: #{_lambda_.1} parent=5 // pred_check_branch
        %258 = sbr.rel (%p255) target = $region12
      $region11: #{_lambda_.1} parent=5 // pred_region
        %s259 = ssub.s32 %s15, 1
        // Predicated region
        $region13: #{_lambda_.1} parent=11 // pred_check
          %p260 = pneg %p187
        $region14: #{_lambda_.1} parent=11 // pred_check_branch
          %262 = sbr.rel (%p260) target = $region16
        $region15: #{_lambda_.1} parent=11 // pred_region
          %p263 = scmp.lt.s32.totalorder %s29, 0
          %s264 = scalar_select %p263, %s29, 0
          %s265 = smul.addr %s264, 4
          %s266 = scalar_lea.vmem %s4, %s265
        $region16: #{_lambda_.1} parent=11 // pred_fallthru
          _
        // Predicated region
        $region17: #{_lambda_.1} parent=11 // pred_check
          %p267 = pneg %p213
        $region18: #{_lambda_.1} parent=11 // pred_check_branch
          %269 = sbr.rel (%p267) target = $region20
        $region19: #{_lambda_.1} parent=11 // pred_region
          %p270 = scmp.lt.s32.totalorder %s29, 0
          %s271 = scalar_select %p270, %s29, 0
          %s272 = scalar_lea.vmem %s5, %s271
        $region20: #{_lambda_.1} parent=11 // pred_fallthru
          _
      $region12: #{_lambda_.1} parent=5 // pred_fallthru
        _
      %p273 = scmp.lt.s32.totalorder %s15, 8
      // Predicated region
      $region21: #{_lambda_.1} parent=5 // pred_check
        %p274 = pneg %p273
      $region22: #{_lambda_.1} parent=5 // pred_check_branch
        %276 = sbr.rel (%p274) target = $region24
      $region23: #{_lambda_.1} parent=5 // pred_region
        // Predicated region
        $region25: #{_lambda_.1} parent=23 // pred_check
          %p277 = pneg %p65
        $region26: #{_lambda_.1} parent=23 // pred_check_branch
          %279 = sbr.rel (%p277) target = $region28
        $region27: #{_lambda_.1} parent=23 // pred_region
          %s280 = sand.u32 %s55, 1
          %s281 = sand.u32 %s55, 1
          %s282 = smul.addr %s281, 16
          %s283 = scalar_lea.vmem [#allocation2], %s282
          %s284 = smul.u32 4, %s24
          %s285 = smul.addr %s284, 2
          %s286 = smul.addr %s23, 16
          %s287 = sadd.s32 %s285, %s286
          %s288 = smul.addr %s22, 64
          %s289 = sadd.s32 %s287, %s288
          %s290 = smul.addr %s289, 4
          %s291 = scalar_lea.vmem %s0, %s290
          // Predicated region
          $region29: #{_lambda_.1} parent=27 // pred_check
            _
          $region30: #{_lambda_.1} parent=27 // pred_check_branch
            %293 = sbr.rel (0) target = $region32
          $region31: #{_lambda_.1} parent=27 // pred_region
            // Predicated region
            $region33: #{_lambda_.1} parent=31 // pred_check
              _
            $region34: #{_lambda_.1} parent=31 // pred_check_branch
              %295 = sbr.rel target = $region36
            $region35: #{_lambda_.1} parent=31 // pred_region
              // Predicated region
              $region48: #{_lambda_.1} parent=35 // pred_check
                _
              $region49: #{_lambda_.1} parent=35 // pred_check_branch
                %316 = sbr.rel (0) target = $region51
              $region50: #{_lambda_.1} parent=35 // pred_region
                loop: start=0, step=1, limit=1
                $region52: #{_lambda_.1} parent=50 // loop_pre_header
                  _
                $region53: #{_lambda_.1} parent=50 // loop_header
                  %s318 = sphi 0, %s322
                  %p319 = scmp.ge.s32.totalorder %s318, 1
                  %s323 = sphi %s291, %s291
                  %s324 = sphi %s283, %s283
                $region54: #{_lambda_.1} parent=50 // loop_header_branch
                  %321 = sbr.rel (%p319) target = $region58
                $region55: #{_lambda_.1} parent=50 // loop_body
                  _
                $region56: #{_lambda_.1} parent=50 // loop_footer
                  %s322 = sadd.s32 1, %s318
                $region57: #{_lambda_.1} parent=50 // loop_footer_branch
                  %317 = sbr.rel target = $region53
                $region58: #{_lambda_.1} parent=50 // loop_exit
                  _
                loop: start=0, step=1, limit=1
                $region59: #{_lambda_.1} parent=50 // loop_pre_header
                  _
                $region60: #{_lambda_.1} parent=50 // loop_header
                  %s327 = sphi 0, %s331
                  %p328 = scmp.ge.s32.totalorder %s327, 1
                  %s332 = sphi %s291, %s291
                  %s333 = sphi %s283, %s283
                $region61: #{_lambda_.1} parent=50 // loop_header_branch
                  %330 = sbr.rel (%p328) target = $region65
                $region62: #{_lambda_.1} parent=50 // loop_body
                  %v334 = vld [vmem:[%s332] sm:$0xf]
                  %335 = vst [vmem:[%s333] sm:$0xf] %v334
                  %v336 = vld [vmem:[%s332 + $0x8] sm:$0xf]
                  %337 = vst [vmem:[%s333 + $0x4] sm:$0xf] %v336
                  %v338 = vld [vmem:[%s332 + $0x10] sm:$0xf]
                  %339 = vst [vmem:[%s333 + $0x8] sm:$0xf] %v338
                  %v340 = vld [vmem:[%s332 + $0x18] sm:$0xf]
                  %341 = vst [vmem:[%s333 + $0xc] sm:$0xf] %v340
                $region63: #{_lambda_.1} parent=50 // loop_footer
                  %s331 = sadd.s32 1, %s327
                $region64: #{_lambda_.1} parent=50 // loop_footer_branch
                  %326 = sbr.rel target = $region60
                $region65: #{_lambda_.1} parent=50 // loop_exit
                  _
              $region51: #{_lambda_.1} parent=35 // pred_fallthru
                _
            $region36: #{_lambda_.1} parent=31 // pred_fallthru
              _
            // Predicated region
            $region37: #{_lambda_.1} parent=31 // pred_check
              _
            $region38: #{_lambda_.1} parent=31 // pred_check_branch
              %297 = sbr.rel (0) target = $region40
            $region39: #{_lambda_.1} parent=31 // pred_region
              loop: start=0, step=1, limit=1
              $region41: #{_lambda_.1} parent=39 // loop_pre_header
                _
              $region42: #{_lambda_.1} parent=39 // loop_header
                %s300 = sphi 0, %s304
                %p301 = scmp.ge.s32.totalorder %s300, 1
                %s305 = sphi %s291, %s291
                %s306 = sphi %s283, %s283
              $region43: #{_lambda_.1} parent=39 // loop_header_branch
                %303 = sbr.rel (%p301) target = $region47
              $region44: #{_lambda_.1} parent=39 // loop_body
                %v307 = vld [vmem:[%s305] sm:$0xf]
                %308 = vst [vmem:[%s306] sm:$0xf] %v307
                %v309 = vld [vmem:[%s305 + $0x8] sm:$0xf]
                %310 = vst [vmem:[%s306 + $0x4] sm:$0xf] %v309
                %v311 = vld [vmem:[%s305 + $0x10] sm:$0xf]
                %312 = vst [vmem:[%s306 + $0x8] sm:$0xf] %v311
                %v313 = vld [vmem:[%s305 + $0x18] sm:$0xf]
                %314 = vst [vmem:[%s306 + $0xc] sm:$0xf] %v313
              $region45: #{_lambda_.1} parent=39 // loop_footer
                %s304 = sadd.s32 1, %s300
              $region46: #{_lambda_.1} parent=39 // loop_footer_branch
                %299 = sbr.rel target = $region42
              $region47: #{_lambda_.1} parent=39 // loop_exit
                _
            $region40: #{_lambda_.1} parent=31 // pred_fallthru
              _
          $region32: #{_lambda_.1} parent=27 // pred_fallthru
            _
          %342 = vnop
        $region28: #{_lambda_.1} parent=23 // pred_fallthru
          _
        // Predicated region
        $region66: #{_lambda_.1} parent=23 // pred_check
          %p343 = pneg %p95
        $region67: #{_lambda_.1} parent=23 // pred_check_branch
          %345 = sbr.rel (%p343) target = $region69
        $region68: #{_lambda_.1} parent=23 // pred_region
          %s346 = sand.u32 %s85, 1
          %s347 = sand.u32 %s85, 1
          %s348 = smul.addr %s347, 16
          %s349 = scalar_lea.vmem [#allocation3], %s348
          %s350 = smul.u32 4, %s24
          %s351 = smul.addr %s350, 2
          %s352 = sadd.s32 1, %s351
          %s353 = smul.addr %s23, 16
          %s354 = sadd.s32 %s352, %s353
          %s355 = smul.addr %s22, 64
          %s356 = sadd.s32 %s354, %s355
          %s357 = smul.addr %s356, 4
          %s358 = scalar_lea.vmem %s1, %s357
          // Predicated region
          $region70: #{_lambda_.1} parent=68 // pred_check
            _
          $region71: #{_lambda_.1} parent=68 // pred_check_branch
            %360 = sbr.rel (0) target = $region73
          $region72: #{_lambda_.1} parent=68 // pred_region
            // Predicated region
            $region74: #{_lambda_.1} parent=72 // pred_check
              _
            $region75: #{_lambda_.1} parent=72 // pred_check_branch
              %362 = sbr.rel target = $region77
            $region76: #{_lambda_.1} parent=72 // pred_region
              // Predicated region
              $region89: #{_lambda_.1} parent=76 // pred_check
                _
              $region90: #{_lambda_.1} parent=76 // pred_check_branch
                %383 = sbr.rel (0) target = $region92
              $region91: #{_lambda_.1} parent=76 // pred_region
                loop: start=0, step=1, limit=1
                $region93: #{_lambda_.1} parent=91 // loop_pre_header
                  _
                $region94: #{_lambda_.1} parent=91 // loop_header
                  %s385 = sphi 0, %s389
                  %p386 = scmp.ge.s32.totalorder %s385, 1
                  %s390 = sphi %s358, %s358
                  %s391 = sphi %s349, %s349
                $region95: #{_lambda_.1} parent=91 // loop_header_branch
                  %388 = sbr.rel (%p386) target = $region99
                $region96: #{_lambda_.1} parent=91 // loop_body
                  _
                $region97: #{_lambda_.1} parent=91 // loop_footer
                  %s389 = sadd.s32 1, %s385
                $region98: #{_lambda_.1} parent=91 // loop_footer_branch
                  %384 = sbr.rel target = $region94
                $region99: #{_lambda_.1} parent=91 // loop_exit
                  _
                loop: start=0, step=1, limit=1
                $region100: #{_lambda_.1} parent=91 // loop_pre_header
                  _
                $region101: #{_lambda_.1} parent=91 // loop_header
                  %s394 = sphi 0, %s398
                  %p395 = scmp.ge.s32.totalorder %s394, 1
                  %s399 = sphi %s358, %s358
                  %s400 = sphi %s349, %s349
                $region102: #{_lambda_.1} parent=91 // loop_header_branch
                  %397 = sbr.rel (%p395) target = $region106
                $region103: #{_lambda_.1} parent=91 // loop_body
                  %v401 = vld [vmem:[%s399] sm:$0xf]
                  %402 = vst [vmem:[%s400] sm:$0xf] %v401
                  %v403 = vld [vmem:[%s399 + $0x8] sm:$0xf]
                  %404 = vst [vmem:[%s400 + $0x4] sm:$0xf] %v403
                  %v405 = vld [vmem:[%s399 + $0x10] sm:$0xf]
                  %406 = vst [vmem:[%s400 + $0x8] sm:$0xf] %v405
                  %v407 = vld [vmem:[%s399 + $0x18] sm:$0xf]
                  %408 = vst [vmem:[%s400 + $0xc] sm:$0xf] %v407
                $region104: #{_lambda_.1} parent=91 // loop_footer
                  %s398 = sadd.s32 1, %s394
                $region105: #{_lambda_.1} parent=91 // loop_footer_branch
                  %393 = sbr.rel target = $region101
                $region106: #{_lambda_.1} parent=91 // loop_exit
                  _
              $region92: #{_lambda_.1} parent=76 // pred_fallthru
                _
            $region77: #{_lambda_.1} parent=72 // pred_fallthru
              _
            // Predicated region
            $region78: #{_lambda_.1} parent=72 // pred_check
              _
            $region79: #{_lambda_.1} parent=72 // pred_check_branch
              %364 = sbr.rel (0) target = $region81
            $region80: #{_lambda_.1} parent=72 // pred_region
              loop: start=0, step=1, limit=1
              $region82: #{_lambda_.1} parent=80 // loop_pre_header
                _
              $region83: #{_lambda_.1} parent=80 // loop_header
                %s367 = sphi 0, %s371
                %p368 = scmp.ge.s32.totalorder %s367, 1
                %s372 = sphi %s358, %s358
                %s373 = sphi %s349, %s349
              $region84: #{_lambda_.1} parent=80 // loop_header_branch
                %370 = sbr.rel (%p368) target = $region88
              $region85: #{_lambda_.1} parent=80 // loop_body
                %v374 = vld [vmem:[%s372] sm:$0xf]
                %375 = vst [vmem:[%s373] sm:$0xf] %v374
                %v376 = vld [vmem:[%s372 + $0x8] sm:$0xf]
                %377 = vst [vmem:[%s373 + $0x4] sm:$0xf] %v376
                %v378 = vld [vmem:[%s372 + $0x10] sm:$0xf]
                %379 = vst [vmem:[%s373 + $0x8] sm:$0xf] %v378
                %v380 = vld [vmem:[%s372 + $0x18] sm:$0xf]
                %381 = vst [vmem:[%s373 + $0xc] sm:$0xf] %v380
              $region86: #{_lambda_.1} parent=80 // loop_footer
                %s371 = sadd.s32 1, %s367
              $region87: #{_lambda_.1} parent=80 // loop_footer_branch
                %366 = sbr.rel target = $region83
              $region88: #{_lambda_.1} parent=80 // loop_exit
                _
            $region81: #{_lambda_.1} parent=72 // pred_fallthru
              _
          $region73: #{_lambda_.1} parent=68 // pred_fallthru
            _
          %409 = vnop
        $region69: #{_lambda_.1} parent=23 // pred_fallthru
          _
        // Predicated region
        $region107: #{_lambda_.1} parent=23 // pred_check
          %p410 = pneg %p125
        $region108: #{_lambda_.1} parent=23 // pred_check_branch
          %412 = sbr.rel (%p410) target = $region110
        $region109: #{_lambda_.1} parent=23 // pred_region
          %s413 = sand.u32 %s115, 1
          %s414 = sand.u32 %s115, 1
          %s415 = smul.addr %s414, 16
          %s416 = scalar_lea.vmem [#allocation4], %s415
          %s417 = smul.u32 4, %s24
          %s418 = smul.addr %s417, 2
          %s419 = sadd.s32 %s418, 8
          %s420 = smul.addr %s23, 16
          %s421 = sadd.s32 %s419, %s420
          %s422 = smul.addr %s22, 64
          %s423 = sadd.s32 %s421, %s422
          %s424 = smul.addr %s423, 4
          %s425 = scalar_lea.vmem %s2, %s424
          // Predicated region
          $region111: #{_lambda_.1} parent=109 // pred_check
            _
          $region112: #{_lambda_.1} parent=109 // pred_check_branch
            %427 = sbr.rel (0) target = $region114
          $region113: #{_lambda_.1} parent=109 // pred_region
            // Predicated region
            $region115: #{_lambda_.1} parent=113 // pred_check
              _
            $region116: #{_lambda_.1} parent=113 // pred_check_branch
              %429 = sbr.rel target = $region118
            $region117: #{_lambda_.1} parent=113 // pred_region
              // Predicated region
              $region130: #{_lambda_.1} parent=117 // pred_check
                _
              $region131: #{_lambda_.1} parent=117 // pred_check_branch
                %450 = sbr.rel (0) target = $region133
              $region132: #{_lambda_.1} parent=117 // pred_region
                loop: start=0, step=1, limit=1
                $region134: #{_lambda_.1} parent=132 // loop_pre_header
                  _
                $region135: #{_lambda_.1} parent=132 // loop_header
                  %s452 = sphi 0, %s456
                  %p453 = scmp.ge.s32.totalorder %s452, 1
                  %s457 = sphi %s425, %s425
                  %s458 = sphi %s416, %s416
                $region136: #{_lambda_.1} parent=132 // loop_header_branch
                  %455 = sbr.rel (%p453) target = $region140
                $region137: #{_lambda_.1} parent=132 // loop_body
                  _
                $region138: #{_lambda_.1} parent=132 // loop_footer
                  %s456 = sadd.s32 1, %s452
                $region139: #{_lambda_.1} parent=132 // loop_footer_branch
                  %451 = sbr.rel target = $region135
                $region140: #{_lambda_.1} parent=132 // loop_exit
                  _
                loop: start=0, step=1, limit=1
                $region141: #{_lambda_.1} parent=132 // loop_pre_header
                  _
                $region142: #{_lambda_.1} parent=132 // loop_header
                  %s461 = sphi 0, %s465
                  %p462 = scmp.ge.s32.totalorder %s461, 1
                  %s466 = sphi %s425, %s425
                  %s467 = sphi %s416, %s416
                $region143: #{_lambda_.1} parent=132 // loop_header_branch
                  %464 = sbr.rel (%p462) target = $region147
                $region144: #{_lambda_.1} parent=132 // loop_body
                  %v468 = vld [vmem:[%s466] sm:$0xf]
                  %469 = vst [vmem:[%s467] sm:$0xf] %v468
                  %v470 = vld [vmem:[%s466 + $0x8] sm:$0xf]
                  %471 = vst [vmem:[%s467 + $0x4] sm:$0xf] %v470
                  %v472 = vld [vmem:[%s466 + $0x10] sm:$0xf]
                  %473 = vst [vmem:[%s467 + $0x8] sm:$0xf] %v472
                  %v474 = vld [vmem:[%s466 + $0x18] sm:$0xf]
                  %475 = vst [vmem:[%s467 + $0xc] sm:$0xf] %v474
                $region145: #{_lambda_.1} parent=132 // loop_footer
                  %s465 = sadd.s32 1, %s461
                $region146: #{_lambda_.1} parent=132 // loop_footer_branch
                  %460 = sbr.rel target = $region142
                $region147: #{_lambda_.1} parent=132 // loop_exit
                  _
              $region133: #{_lambda_.1} parent=117 // pred_fallthru
                _
            $region118: #{_lambda_.1} parent=113 // pred_fallthru
              _
            // Predicated region
            $region119: #{_lambda_.1} parent=113 // pred_check
              _
            $region120: #{_lambda_.1} parent=113 // pred_check_branch
              %431 = sbr.rel (0) target = $region122
            $region121: #{_lambda_.1} parent=113 // pred_region
              loop: start=0, step=1, limit=1
              $region123: #{_lambda_.1} parent=121 // loop_pre_header
                _
              $region124: #{_lambda_.1} parent=121 // loop_header
                %s434 = sphi 0, %s438
                %p435 = scmp.ge.s32.totalorder %s434, 1
                %s439 = sphi %s425, %s425
                %s440 = sphi %s416, %s416
              $region125: #{_lambda_.1} parent=121 // loop_header_branch
                %437 = sbr.rel (%p435) target = $region129
              $region126: #{_lambda_.1} parent=121 // loop_body
                %v441 = vld [vmem:[%s439] sm:$0xf]
                %442 = vst [vmem:[%s440] sm:$0xf] %v441
                %v443 = vld [vmem:[%s439 + $0x8] sm:$0xf]
                %444 = vst [vmem:[%s440 + $0x4] sm:$0xf] %v443
                %v445 = vld [vmem:[%s439 + $0x10] sm:$0xf]
                %446 = vst [vmem:[%s440 + $0x8] sm:$0xf] %v445
                %v447 = vld [vmem:[%s439 + $0x18] sm:$0xf]
                %448 = vst [vmem:[%s440 + $0xc] sm:$0xf] %v447
              $region127: #{_lambda_.1} parent=121 // loop_footer
                %s438 = sadd.s32 1, %s434
              $region128: #{_lambda_.1} parent=121 // loop_footer_branch
                %433 = sbr.rel target = $region124
              $region129: #{_lambda_.1} parent=121 // loop_exit
                _
            $region122: #{_lambda_.1} parent=113 // pred_fallthru
              _
          $region114: #{_lambda_.1} parent=109 // pred_fallthru
            _
          %476 = vnop
        $region110: #{_lambda_.1} parent=23 // pred_fallthru
          _
        // Predicated region
        $region148: #{_lambda_.1} parent=23 // pred_check
          %p477 = pneg %p155
        $region149: #{_lambda_.1} parent=23 // pred_check_branch
          %479 = sbr.rel (%p477) target = $region151
        $region150: #{_lambda_.1} parent=23 // pred_region
          %s480 = sand.u32 %s145, 1
          %s481 = sand.u32 %s145, 1
          %s482 = smul.addr %s481, 16
          %s483 = scalar_lea.vmem [#allocation5], %s482
          %s484 = smul.u32 4, %s24
          %s485 = smul.addr %s484, 2
          %s486 = sadd.s32 1, %s485
          %s487 = sadd.s32 %s486, 8
          %s488 = smul.addr %s23, 16
          %s489 = sadd.s32 %s487, %s488
          %s490 = smul.addr %s22, 64
          %s491 = sadd.s32 %s489, %s490
          %s492 = smul.addr %s491, 4
          %s493 = scalar_lea.vmem %s3, %s492
          // Predicated region
          $region152: #{_lambda_.1} parent=150 // pred_check
            _
          $region153: #{_lambda_.1} parent=150 // pred_check_branch
            %495 = sbr.rel (0) target = $region155
          $region154: #{_lambda_.1} parent=150 // pred_region
            // Predicated region
            $region156: #{_lambda_.1} parent=154 // pred_check
              _
            $region157: #{_lambda_.1} parent=154 // pred_check_branch
              %497 = sbr.rel target = $region159
            $region158: #{_lambda_.1} parent=154 // pred_region
              // Predicated region
              $region171: #{_lambda_.1} parent=158 // pred_check
                _
              $region172: #{_lambda_.1} parent=158 // pred_check_branch
                %518 = sbr.rel (0) target = $region174
              $region173: #{_lambda_.1} parent=158 // pred_region
                loop: start=0, step=1, limit=1
                $region175: #{_lambda_.1} parent=173 // loop_pre_header
                  _
                $region176: #{_lambda_.1} parent=173 // loop_header
                  %s520 = sphi 0, %s524
                  %p521 = scmp.ge.s32.totalorder %s520, 1
                  %s525 = sphi %s493, %s493
                  %s526 = sphi %s483, %s483
                $region177: #{_lambda_.1} parent=173 // loop_header_branch
                  %523 = sbr.rel (%p521) target = $region181
                $region178: #{_lambda_.1} parent=173 // loop_body
                  _
                $region179: #{_lambda_.1} parent=173 // loop_footer
                  %s524 = sadd.s32 1, %s520
                $region180: #{_lambda_.1} parent=173 // loop_footer_branch
                  %519 = sbr.rel target = $region176
                $region181: #{_lambda_.1} parent=173 // loop_exit
                  _
                loop: start=0, step=1, limit=1
                $region182: #{_lambda_.1} parent=173 // loop_pre_header
                  _
                $region183: #{_lambda_.1} parent=173 // loop_header
                  %s529 = sphi 0, %s533
                  %p530 = scmp.ge.s32.totalorder %s529, 1
                  %s534 = sphi %s493, %s493
                  %s535 = sphi %s483, %s483
                $region184: #{_lambda_.1} parent=173 // loop_header_branch
                  %532 = sbr.rel (%p530) target = $region188
                $region185: #{_lambda_.1} parent=173 // loop_body
                  %v536 = vld [vmem:[%s534] sm:$0xf]
                  %537 = vst [vmem:[%s535] sm:$0xf] %v536
                  %v538 = vld [vmem:[%s534 + $0x8] sm:$0xf]
                  %539 = vst [vmem:[%s535 + $0x4] sm:$0xf] %v538
                  %v540 = vld [vmem:[%s534 + $0x10] sm:$0xf]
                  %541 = vst [vmem:[%s535 + $0x8] sm:$0xf] %v540
                  %v542 = vld [vmem:[%s534 + $0x18] sm:$0xf]
                  %543 = vst [vmem:[%s535 + $0xc] sm:$0xf] %v542
                $region186: #{_lambda_.1} parent=173 // loop_footer
                  %s533 = sadd.s32 1, %s529
                $region187: #{_lambda_.1} parent=173 // loop_footer_branch
                  %528 = sbr.rel target = $region183
                $region188: #{_lambda_.1} parent=173 // loop_exit
                  _
              $region174: #{_lambda_.1} parent=158 // pred_fallthru
                _
            $region159: #{_lambda_.1} parent=154 // pred_fallthru
              _
            // Predicated region
            $region160: #{_lambda_.1} parent=154 // pred_check
              _
            $region161: #{_lambda_.1} parent=154 // pred_check_branch
              %499 = sbr.rel (0) target = $region163
            $region162: #{_lambda_.1} parent=154 // pred_region
              loop: start=0, step=1, limit=1
              $region164: #{_lambda_.1} parent=162 // loop_pre_header
                _
              $region165: #{_lambda_.1} parent=162 // loop_header
                %s502 = sphi 0, %s506
                %p503 = scmp.ge.s32.totalorder %s502, 1
                %s507 = sphi %s493, %s493
                %s508 = sphi %s483, %s483
              $region166: #{_lambda_.1} parent=162 // loop_header_branch
                %505 = sbr.rel (%p503) target = $region170
              $region167: #{_lambda_.1} parent=162 // loop_body
                %v509 = vld [vmem:[%s507] sm:$0xf]
                %510 = vst [vmem:[%s508] sm:$0xf] %v509
                %v511 = vld [vmem:[%s507 + $0x8] sm:$0xf]
                %512 = vst [vmem:[%s508 + $0x4] sm:$0xf] %v511
                %v513 = vld [vmem:[%s507 + $0x10] sm:$0xf]
                %514 = vst [vmem:[%s508 + $0x8] sm:$0xf] %v513
                %v515 = vld [vmem:[%s507 + $0x18] sm:$0xf]
                %516 = vst [vmem:[%s508 + $0xc] sm:$0xf] %v515
              $region168: #{_lambda_.1} parent=162 // loop_footer
                %s506 = sadd.s32 1, %s502
              $region169: #{_lambda_.1} parent=162 // loop_footer_branch
                %501 = sbr.rel target = $region165
              $region170: #{_lambda_.1} parent=162 // loop_exit
                _
            $region163: #{_lambda_.1} parent=154 // pred_fallthru
              _
          $region155: #{_lambda_.1} parent=150 // pred_fallthru
            _
          %544 = vnop
        $region151: #{_lambda_.1} parent=23 // pred_fallthru
          _
      $region24: #{_lambda_.1} parent=5 // pred_fallthru
        _
      %p545 = scmp.le.s32.totalorder 1, %s15
      %p546 = scmp.lt.s32.totalorder %s15, 9
      %p547 = pnand %p545, %p546
      %p548 = pneg %p547
      // Predicated region
      $region189: #{_lambda_.1} parent=5 // pred_check
        _
      $region190: #{_lambda_.1} parent=5 // pred_check_branch
        %550 = sbr.rel (%p547) target = $region192
      $region191: #{_lambda_.1} parent=5 // pred_region
        %s551 = ssub.s32 %s15, 1
        %s552 = sand.u32 %s58, 1
        %s553 = sand.u32 %s58, 1
        %s554 = smul.addr %s553, 16
        %s555 = scalar_lea.vmem [#allocation2], %s554
        // Predicated region
        $region193: #{_lambda_.1} parent=191 // pred_check
          %p556 = pneg %p71
        $region194: #{_lambda_.1} parent=191 // pred_check_branch
          %558 = sbr.rel (%p556) target = $region196
        $region195: #{_lambda_.1} parent=191 // pred_region
          _
        $region196: #{_lambda_.1} parent=191 // pred_fallthru
          _
        %s559 = sand.u32 %s88, 1
        %s560 = sand.u32 %s88, 1
        %s561 = smul.addr %s560, 16
        %s562 = scalar_lea.vmem [#allocation3], %s561
        // Predicated region
        $region197: #{_lambda_.1} parent=191 // pred_check
          %p563 = pneg %p101
        $region198: #{_lambda_.1} parent=191 // pred_check_branch
          %565 = sbr.rel (%p563) target = $region200
        $region199: #{_lambda_.1} parent=191 // pred_region
          _
        $region200: #{_lambda_.1} parent=191 // pred_fallthru
          _
        %s566 = sand.u32 %s118, 1
        %s567 = sand.u32 %s118, 1
        %s568 = smul.addr %s567, 16
        %s569 = scalar_lea.vmem [#allocation4], %s568
        // Predicated region
        $region201: #{_lambda_.1} parent=191 // pred_check
          %p570 = pneg %p131
        $region202: #{_lambda_.1} parent=191 // pred_check_branch
          %572 = sbr.rel (%p570) target = $region204
        $region203: #{_lambda_.1} parent=191 // pred_region
          _
        $region204: #{_lambda_.1} parent=191 // pred_fallthru
          _
        %s573 = sand.u32 %s148, 1
        %s574 = sand.u32 %s148, 1
        %s575 = smul.addr %s574, 16
        %s576 = scalar_lea.vmem [#allocation5], %s575
        // Predicated region
        $region205: #{_lambda_.1} parent=191 // pred_check
          %p577 = pneg %p161
        $region206: #{_lambda_.1} parent=191 // pred_check_branch
          %579 = sbr.rel (%p577) target = $region208
        $region207: #{_lambda_.1} parent=191 // pred_region
          _
        $region208: #{_lambda_.1} parent=191 // pred_fallthru
          _
        %s580 = sand.u32 %s58, 1
        %s581 = sand.u32 %s58, 1
        %s582 = smul.addr %s581, 16
        %s583 = scalar_lea.vmem [#allocation2], %s582
        %p584 = pneg %p71
        %p585 = pneg %p68
        %s586 = sand.u32 %s88, 1
        %s587 = sand.u32 %s88, 1
        %s588 = smul.addr %s587, 16
        %s589 = scalar_lea.vmem [#allocation3], %s588
        %p590 = pneg %p101
        %p591 = pneg %p98
        %s592 = sand.u32 %s118, 1
        %s593 = sand.u32 %s118, 1
        %s594 = smul.addr %s593, 16
        %s595 = scalar_lea.vmem [#allocation4], %s594
        %p596 = pneg %p131
        %p597 = pneg %p128
        %s598 = sand.u32 %s148, 1
        %s599 = sand.u32 %s148, 1
        %s600 = smul.addr %s599, 16
        %s601 = scalar_lea.vmem [#allocation5], %s600
        %p602 = pneg %p161
        %p603 = pneg %p158
        %p604 = scmp.lt.s32.totalorder %s29, 0
        %s605 = scalar_select %p604, %s29, 0
        %s606 = smul.addr %s605, 4
        %s607 = scalar_lea.vmem %s4, %s606
        %p608 = pneg %p187
        %p609 = pneg %p184
        %p610 = scmp.lt.s32.totalorder %s29, 0
        %s611 = scalar_select %p610, %s29, 0
        %s612 = scalar_lea.vmem %s5, %s611
        %p613 = pneg %p213
        %p614 = pneg %p210
        %p615 = pneg %p245
        %p616 = pneg %p242
        %s617 = sand.u32 %s232, 1
        %s618 = scalar_lea.sflag [#allocation7], %s617
        %s619 = sand.u32 %s232, 1
        %s620 = smul.addr %s619, 16
        %s621 = scalar_lea.vmem [#allocation6], %s620
        %s622 = smul.u32 4, %s28
        %s623 = smul.u32 4, %s28
        %s624 = smul.u32 4, %s28
        %s625 = smul.u32 4, %s28
        %p626 = scmp.lt.s32.totalorder %s29, 0
        %s627 = scalar_select %p626, %s29, 0
        %s628 = smul.addr %s627, 4
        %s629 = scalar_lea.vmem %s4, %s628
        %p630 = scmp.lt.s32.totalorder %s29, 0
        %s631 = scalar_select %p630, %s29, 0
        %s632 = scalar_lea.vmem %s5, %s631
        %s633 = smul.u32 4, %s28
        %v635 = vld [vmem:[%s555] sm:$0xf]
        %v636 = vld [vmem:[%s555 + $0x4] sm:$0xf]
        %v637 = vld [vmem:[%s555 + $0x8] sm:$0xf]
        %v638 = vld [vmem:[%s555 + $0xc] sm:$0xf]
        %v639 = vld [vmem:[%s562] sm:$0xf]
        %v640 = vld [vmem:[%s562 + $0x4] sm:$0xf]
        %v641 = vld [vmem:[%s562 + $0x8] sm:$0xf]
        %v642 = vld [vmem:[%s562 + $0xc] sm:$0xf]
        %v643 = vld [vmem:[%s569] sm:$0xf]
        %v644 = vld [vmem:[%s569 + $0x4] sm:$0xf]
        %v645 = vld [vmem:[%s569 + $0x8] sm:$0xf]
        %v646 = vld [vmem:[%s569 + $0xc] sm:$0xf]
        %v647 = vld [vmem:[%s576] sm:$0xf]
        %v648 = vld [vmem:[%s576 + $0x4] sm:$0xf]
        %v649 = vld [vmem:[%s576 + $0x8] sm:$0xf]
        %v650 = vld [vmem:[%s576 + $0xc] sm:$0xf]
        %vm651 = vcmask 257024
        %v652 = vsel %vm651, %v635, 0.0
        %653 = vadd.xlane.f32.xlu0 %v652
        %v654 = vpop.xlane.xlu0 %653
        %v655 = vsel %vm651, %v636, 0.0
        %656 = vadd.xlane.f32.xlu0 %v655
        %v657 = vpop.xlane.xlu0 %656
        %v658 = vsel %vm651, %v637, 0.0
        %659 = vadd.xlane.f32.xlu0 %v658
        %v660 = vpop.xlane.xlu0 %659
        %v661 = vsel %vm651, %v638, 0.0
        %662 = vadd.xlane.f32.xlu0 %v661
        %v663 = vpop.xlane.xlu0 %662
        %v664 = vsel %vm651, %v639, 0.0
        %665 = vadd.xlane.f32.xlu0 %v664
        %v666 = vpop.xlane.xlu0 %665
        %v667 = vsel %vm651, %v640, 0.0
        %668 = vadd.xlane.f32.xlu0 %v667
        %v669 = vpop.xlane.xlu0 %668
        %v670 = vsel %vm651, %v641, 0.0
        %671 = vadd.xlane.f32.xlu0 %v670
        %v672 = vpop.xlane.xlu0 %671
        %v673 = vsel %vm651, %v642, 0.0
        %674 = vadd.xlane.f32.xlu0 %v673
        %v675 = vpop.xlane.xlu0 %674
        %v676 = vadd.f32 %v654, %v666
        %v677 = vadd.f32 %v657, %v669
        %v678 = vadd.f32 %v660, %v672
        %v679 = vadd.f32 %v663, %v675
        %v680 = vsel %vm651, %v643, 0.0
        %681 = vadd.xlane.f32.xlu0 %v680
        %v682 = vpop.xlane.xlu0 %681
        %v683 = vsel %vm651, %v644, 0.0
        %684 = vadd.xlane.f32.xlu0 %v683
        %v685 = vpop.xlane.xlu0 %684
        %v686 = vsel %vm651, %v645, 0.0
        %687 = vadd.xlane.f32.xlu0 %v686
        %v688 = vpop.xlane.xlu0 %687
        %v689 = vsel %vm651, %v646, 0.0
        %690 = vadd.xlane.f32.xlu0 %v689
        %v691 = vpop.xlane.xlu0 %690
        %v692 = vadd.f32 %v676, %v682
        %v693 = vadd.f32 %v677, %v685
        %v694 = vadd.f32 %v678, %v688
        %v695 = vadd.f32 %v679, %v691
        %v696 = vsel %vm651, %v647, 0.0
        %697 = vadd.xlane.f32.xlu0 %v696
        %v698 = vpop.xlane.xlu0 %697
        %v699 = vsel %vm651, %v648, 0.0
        %700 = vadd.xlane.f32.xlu0 %v699
        %v701 = vpop.xlane.xlu0 %700
        %v702 = vsel %vm651, %v649, 0.0
        %703 = vadd.xlane.f32.xlu0 %v702
        %v704 = vpop.xlane.xlu0 %703
        %v705 = vsel %vm651, %v650, 0.0
        %706 = vadd.xlane.f32.xlu0 %v705
        %v707 = vpop.xlane.xlu0 %706
        %v708 = vadd.f32 %v692, %v698
        %v709 = vadd.f32 %v693, %v701
        %v710 = vadd.f32 %v694, %v704
        %v711 = vadd.f32 %v695, %v707
        %v712 = vmul.f32 %v708, 0.0078125
        %v713 = vmul.f32 %v709, 0.0078125
        %v714 = vmul.f32 %v710, 0.0078125
        %v715 = vmul.f32 %v711, 0.0078125
        %v716 = vsub.f32 %v635, %v712
        %v717 = vsub.f32 %v636, %v713
        %v718 = vsub.f32 %v637, %v714
        %v719 = vsub.f32 %v638, %v715
        %v720 = vsub.f32 %v639, %v712
        %v721 = vsub.f32 %v640, %v713
        %v722 = vsub.f32 %v641, %v714
        %v723 = vsub.f32 %v642, %v715
        %v724 = vsub.f32 %v643, %v712
        %v725 = vsub.f32 %v644, %v713
        %v726 = vsub.f32 %v645, %v714
        %v727 = vsub.f32 %v646, %v715
        %v728 = vsub.f32 %v647, %v712
        %v729 = vsub.f32 %v648, %v713
        %v730 = vsub.f32 %v649, %v714
        %v731 = vsub.f32 %v650, %v715
        %v732 = vmul.f32 %v716, %v716
        %v733 = vmul.f32 %v717, %v717
        %v734 = vmul.f32 %v718, %v718
        %v735 = vmul.f32 %v719, %v719
        %v736 = vsel %vm651, %v732, 0.0
        %737 = vadd.xlane.f32.xlu0 %v736
        %v738 = vpop.xlane.xlu0 %737
        %v739 = vsel %vm651, %v733, 0.0
        %740 = vadd.xlane.f32.xlu0 %v739
        %v741 = vpop.xlane.xlu0 %740
        %v742 = vsel %vm651, %v734, 0.0
        %743 = vadd.xlane.f32.xlu0 %v742
        %v744 = vpop.xlane.xlu0 %743
        %v745 = vsel %vm651, %v735, 0.0
        %746 = vadd.xlane.f32.xlu0 %v745
        %v747 = vpop.xlane.xlu0 %746
        %v748 = vmul.f32 %v720, %v720
        %v749 = vmul.f32 %v721, %v721
        %v750 = vmul.f32 %v722, %v722
        %v751 = vmul.f32 %v723, %v723
        %v752 = vsel %vm651, %v748, 0.0
        %753 = vadd.xlane.f32.xlu0 %v752
        %v754 = vpop.xlane.xlu0 %753
        %v755 = vsel %vm651, %v749, 0.0
        %756 = vadd.xlane.f32.xlu0 %v755
        %v757 = vpop.xlane.xlu0 %756
        %v758 = vsel %vm651, %v750, 0.0
        %759 = vadd.xlane.f32.xlu0 %v758
        %v760 = vpop.xlane.xlu0 %759
        %v761 = vsel %vm651, %v751, 0.0
        %762 = vadd.xlane.f32.xlu0 %v761
        %v763 = vpop.xlane.xlu0 %762
        %v764 = vadd.f32 %v738, %v754
        %v765 = vadd.f32 %v741, %v757
        %v766 = vadd.f32 %v744, %v760
        %v767 = vadd.f32 %v747, %v763
        %v768 = vmul.f32 %v724, %v724
        %v769 = vmul.f32 %v725, %v725
        %v770 = vmul.f32 %v726, %v726
        %v771 = vmul.f32 %v727, %v727
        %v772 = vsel %vm651, %v768, 0.0
        %773 = vadd.xlane.f32.xlu0 %v772
        %v774 = vpop.xlane.xlu0 %773
        %v775 = vsel %vm651, %v769, 0.0
        %776 = vadd.xlane.f32.xlu0 %v775
        %v777 = vpop.xlane.xlu0 %776
        %v778 = vsel %vm651, %v770, 0.0
        %779 = vadd.xlane.f32.xlu0 %v778
        %v780 = vpop.xlane.xlu0 %779
        %v781 = vsel %vm651, %v771, 0.0
        %782 = vadd.xlane.f32.xlu0 %v781
        %v783 = vpop.xlane.xlu0 %782
        %v784 = vadd.f32 %v764, %v774
        %v785 = vadd.f32 %v765, %v777
        %v786 = vadd.f32 %v766, %v780
        %v787 = vadd.f32 %v767, %v783
        %v788 = vmul.f32 %v728, %v728
        %v789 = vmul.f32 %v729, %v729
        %v790 = vmul.f32 %v730, %v730
        %v791 = vmul.f32 %v731, %v731
        %v792 = vsel %vm651, %v788, 0.0
        %793 = vadd.xlane.f32.xlu0 %v792
        %v794 = vpop.xlane.xlu0 %793
        %v795 = vsel %vm651, %v789, 0.0
        %796 = vadd.xlane.f32.xlu0 %v795
        %v797 = vpop.xlane.xlu0 %796
        %v798 = vsel %vm651, %v790, 0.0
        %799 = vadd.xlane.f32.xlu0 %v798
        %v800 = vpop.xlane.xlu0 %799
        %v801 = vsel %vm651, %v791, 0.0
        %802 = vadd.xlane.f32.xlu0 %v801
        %v803 = vpop.xlane.xlu0 %802
        %v804 = vadd.f32 %v784, %v794
        %v805 = vadd.f32 %v785, %v797
        %v806 = vadd.f32 %v786, %v800
        %v807 = vadd.f32 %v787, %v803
        %v808 = vmul.f32 %v804, 0.0078125
        %v809 = vmul.f32 %v805, 0.0078125
        %v810 = vmul.f32 %v806, 0.0078125
        %v811 = vmul.f32 %v807, 0.0078125
        %v812 = vadd.f32 %v808, 1e-05
        %v813 = vadd.f32 %v809, 1e-05
        %v814 = vadd.f32 %v810, 1e-05
        %v815 = vadd.f32 %v811, 1e-05
        %v816 = vrsqrt.pop %v812
        %v817 = vrsqrt.pop %v813
        %v818 = vrsqrt.pop %v814
        %v819 = vrsqrt.pop %v815
        %v820 = vmul.f32 %v716, %v816
        %v821 = vmul.f32 %v717, %v817
        %v822 = vmul.f32 %v718, %v818
        %v823 = vmul.f32 %v719, %v819
        %v824 = vpack.c.bf16 %v820, %v820
        %v825 = vpack.c.bf16 %v821, %v821
        %v826 = vpack.c.bf16 %v822, %v822
        %v827 = vpack.c.bf16 %v823, %v823
        %v828 = vmul.f32 %v720, %v816
        %v829 = vmul.f32 %v721, %v817
        %v830 = vmul.f32 %v722, %v818
        %v831 = vmul.f32 %v723, %v819
        %v832 = vpack.c.bf16 %v828, %v828
        %v833 = vpack.c.bf16 %v829, %v829
        %v834 = vpack.c.bf16 %v830, %v830
        %v835 = vpack.c.bf16 %v831, %v831
        %v836 = vmul.f32 %v724, %v816
        %v837 = vmul.f32 %v725, %v817
        %v838 = vmul.f32 %v726, %v818
        %v839 = vmul.f32 %v727, %v819
        %v840 = vpack.c.bf16 %v836, %v836
        %v841 = vpack.c.bf16 %v837, %v837
        %v842 = vpack.c.bf16 %v838, %v838
        %v843 = vpack.c.bf16 %v839, %v839
        %v844 = vmul.f32 %v728, %v816
        %v845 = vmul.f32 %v729, %v817
        %v846 = vmul.f32 %v730, %v818
        %v847 = vmul.f32 %v731, %v819
        %v848 = vpack.c.bf16 %v844, %v844
        %v849 = vpack.c.bf16 %v845, %v845
        %v850 = vpack.c.bf16 %v846, %v846
        %v851 = vpack.c.bf16 %v847, %v847
        %v852 = vld [vmem:[%s629] sm:$0xf]
        %v853 = vld [vmem:[%s629 + $0x4] sm:$0xf]
        %v854 = vld [vmem:[%s629 + $0x8] sm:$0xf]
        %v855 = vld [vmem:[%s629 + $0xc] sm:$0xf]
        %v856 = vld [vmem:[%s629 + $0x10] sm:$0xf]
        %v857 = vld [vmem:[%s629 + $0x14] sm:$0xf]
        %v858 = vld [vmem:[%s629 + $0x18] sm:$0xf]
        %v859 = vld [vmem:[%s629 + $0x1c] sm:$0xf]
        %v860 = vld [vmem:[%s629 + $0x20] sm:$0xf]
        %v861 = vld [vmem:[%s629 + $0x24] sm:$0xf]
        %v862 = vld [vmem:[%s629 + $0x28] sm:$0xf]
        %v863 = vld [vmem:[%s629 + $0x2c] sm:$0xf]
        %v864 = vld [vmem:[%s629 + $0x30] sm:$0xf]
        %v865 = vld [vmem:[%s629 + $0x34] sm:$0xf]
        %v866 = vld [vmem:[%s629 + $0x38] sm:$0xf]
        %v867 = vld [vmem:[%s629 + $0x3c] sm:$0xf]
        %v868 = vld [vmem:[%s632] sm:$0x1]
        %v873 = vunpack.c.l.b16 %v856
        %v874 = vunpack.c.l.b16 %v857
        %v875 = vunpack.c.l.b16 %v858
        %v876 = vunpack.c.l.b16 %v859
        %v877 = vpack.c.b16 %v874, %v873
        %v878 = vpack.c.b16 %v876, %v875
        %vm881 = vcmask 261120
        %v883 = vsel %vm881, %v832, 0
        %885 = vmatprep.subr.bf16.mxu0 0
        %886 = vmatpush1.bf16.msra.mxu0 %v877
        %887 = vmatprep.subr.bf16.mxu0 0
        %888 = vmatpush1.bf16.msra.mxu0 %v878
        %889 = vmatprep.subr.bf16.mxu0 0
        %890 = vmatpush1.bf16.msra.mxu0 0
        %891 = vmatprep.subr.bf16.mxu0 0
        %892 = vmatpush1.bf16.msra.mxu0 0
        %893 = vmatprep.subr.bf16.mxu0 0
        %894 = vmatpush1.bf16.msra.mxu0 0
        %895 = vmatprep.subr.bf16.mxu0 0
        %896 = vmatpush1.bf16.msra.mxu0 0
        %897 = vmatprep.subr.bf16.mxu0 0
        %898 = vmatpush1.bf16.msra.mxu0 0
        %899 = vmatprep.subr.bf16.mxu0 0
        %900 = vmatpush1.bf16.msra.mxu0 0
        %901 = vmatprep.subr.bf16.mxu0 0
        %902 = vmatpush1.bf16.msra.mxu0 0
        %903 = vmatprep.subr.bf16.mxu0 0
        %904 = vmatpush1.bf16.msra.mxu0 0
        %905 = vmatprep.subr.bf16.mxu0 0
        %906 = vmatpush1.bf16.msra.mxu0 0
        %907 = vmatprep.subr.bf16.mxu0 0
        %908 = vmatpush1.bf16.msra.mxu0 0
        %909 = vmatprep.subr.bf16.mxu0 0
        %910 = vmatpush1.bf16.msra.mxu0 0
        %911 = vmatprep.subr.bf16.mxu0 0
        %912 = vmatpush1.bf16.msra.mxu0 0
        %913 = vmatprep.subr.bf16.mxu0 0
        %914 = vmatpush1.bf16.msra.mxu0 0
        %915 = vmatprep.subr.bf16.mxu0 0
        %916 = vmatpush1.bf16.msra.mxu0 0
        %917 = vmatprep.mubr.bf16.mxu0 0
        %918 = vmatmul.mubr.bf16.gmra.mrb[0].mxu0 %v883
        %v919 = vpop.f32.mrb[0].mxu0
        %v920 = vadd.f32 0.0, %v919
        %v921 = vpop.f32.mrb[0].mxu0
        %v922 = vpop.f32.mrb[0].mxu0
        %v923 = vpop.f32.mrb[0].mxu0
        %924 = vdwg.mxu0
        %v929 = vunpack.c.l.b16 %v852
        %v930 = vunpack.c.l.b16 %v853
        %v931 = vunpack.c.l.b16 %v854
        %v932 = vunpack.c.l.b16 %v855
        %v933 = vpack.c.b16 %v930, %v929
        %v934 = vpack.c.b16 %v932, %v931
        %v938 = vsel %vm881, %v824, 0
        %940 = vmatprep.subr.bf16.mxu0 0
        %941 = vmatpush1.bf16.msra.mxu0 %v933
        %942 = vmatprep.subr.bf16.mxu0 0
        %943 = vmatpush1.bf16.msra.mxu0 %v934
        %944 = vmatprep.subr.bf16.mxu0 0
        %945 = vmatpush1.bf16.msra.mxu0 0
        %946 = vmatprep.subr.bf16.mxu0 0
        %947 = vmatpush1.bf16.msra.mxu0 0
        %948 = vmatprep.subr.bf16.mxu0 0
        %949 = vmatpush1.bf16.msra.mxu0 0
        %950 = vmatprep.subr.bf16.mxu0 0
        %951 = vmatpush1.bf16.msra.mxu0 0
        %952 = vmatprep.subr.bf16.mxu0 0
        %953 = vmatpush1.bf16.msra.mxu0 0
        %954 = vmatprep.subr.bf16.mxu0 0
        %955 = vmatpush1.bf16.msra.mxu0 0
        %956 = vmatprep.subr.bf16.mxu0 0
        %957 = vmatpush1.bf16.msra.mxu0 0
        %958 = vmatprep.subr.bf16.mxu0 0
        %959 = vmatpush1.bf16.msra.mxu0 0
        %960 = vmatprep.subr.bf16.mxu0 0
        %961 = vmatpush1.bf16.msra.mxu0 0
        %962 = vmatprep.subr.bf16.mxu0 0
        %963 = vmatpush1.bf16.msra.mxu0 0
        %964 = vmatprep.subr.bf16.mxu0 0
        %965 = vmatpush1.bf16.msra.mxu0 0
        %966 = vmatprep.subr.bf16.mxu0 0
        %967 = vmatpush1.bf16.msra.mxu0 0
        %968 = vmatprep.subr.bf16.mxu0 0
        %969 = vmatpush1.bf16.msra.mxu0 0
        %970 = vmatprep.subr.bf16.mxu0 0
        %971 = vmatpush1.bf16.msra.mxu0 0
        %972 = vmatprep.mubr.bf16.mxu0 0
        %973 = vmatmul.mubr.bf16.gmra.mrb[0].mxu0 %v938
        %v974 = vpop.f32.mrb[0].mxu0
        %v975 = vadd.f32 %v920, %v974
        %v976 = vpop.f32.mrb[0].mxu0
        %v977 = vpop.f32.mrb[0].mxu0
        %v978 = vpop.f32.mrb[0].mxu0
        %979 = vdwg.mxu0
        %v984 = vunpack.c.l.b16 %v860
        %v985 = vunpack.c.l.b16 %v861
        %v986 = vunpack.c.l.b16 %v862
        %v987 = vunpack.c.l.b16 %v863
        %v988 = vpack.c.b16 %v985, %v984
        %v989 = vpack.c.b16 %v987, %v986
        %v993 = vsel %vm881, %v840, 0
        %995 = vmatprep.subr.bf16.mxu0 0
        %996 = vmatpush1.bf16.msra.mxu0 %v988
        %997 = vmatprep.subr.bf16.mxu0 0
        %998 = vmatpush1.bf16.msra.mxu0 %v989
        %999 = vmatprep.subr.bf16.mxu0 0
        %1000 = vmatpush1.bf16.msra.mxu0 0
        %1001 = vmatprep.subr.bf16.mxu0 0
        %1002 = vmatpush1.bf16.msra.mxu0 0
        %1003 = vmatprep.subr.bf16.mxu0 0
        %1004 = vmatpush1.bf16.msra.mxu0 0
        %1005 = vmatprep.subr.bf16.mxu0 0
        %1006 = vmatpush1.bf16.msra.mxu0 0
        %1007 = vmatprep.subr.bf16.mxu0 0
        %1008 = vmatpush1.bf16.msra.mxu0 0
        %1009 = vmatprep.subr.bf16.mxu0 0
        %1010 = vmatpush1.bf16.msra.mxu0 0
        %1011 = vmatprep.subr.bf16.mxu0 0
        %1012 = vmatpush1.bf16.msra.mxu0 0
        %1013 = vmatprep.subr.bf16.mxu0 0
        %1014 = vmatpush1.bf16.msra.mxu0 0
        %1015 = vmatprep.subr.bf16.mxu0 0
        %1016 = vmatpush1.bf16.msra.mxu0 0
        %1017 = vmatprep.subr.bf16.mxu0 0
        %1018 = vmatpush1.bf16.msra.mxu0 0
        %1019 = vmatprep.subr.bf16.mxu0 0
        %1020 = vmatpush1.bf16.msra.mxu0 0
        %1021 = vmatprep.subr.bf16.mxu0 0
        %1022 = vmatpush1.bf16.msra.mxu0 0
        %1023 = vmatprep.subr.bf16.mxu0 0
        %1024 = vmatpush1.bf16.msra.mxu0 0
        %1025 = vmatprep.subr.bf16.mxu0 0
        %1026 = vmatpush1.bf16.msra.mxu0 0
        %1027 = vmatprep.mubr.bf16.mxu0 0
        %1028 = vmatmul.mubr.bf16.gmra.mrb[0].mxu0 %v993
        %v1029 = vpop.f32.mrb[0].mxu0
        %v1030 = vadd.f32 0.0, %v1029
        %v1031 = vpop.f32.mrb[0].mxu0
        %v1032 = vpop.f32.mrb[0].mxu0
        %v1033 = vpop.f32.mrb[0].mxu0
        %1034 = vdwg.mxu0
        %v1035 = vadd.f32 %v975, %v1030
        %v1040 = vunpack.c.l.b16 %v864
        %v1041 = vunpack.c.l.b16 %v865
        %v1042 = vunpack.c.l.b16 %v866
        %v1043 = vunpack.c.l.b16 %v867
        %v1044 = vpack.c.b16 %v1041, %v1040
        %v1045 = vpack.c.b16 %v1043, %v1042
        %v1049 = vsel %vm881, %v848, 0
        %1051 = vmatprep.subr.bf16.mxu0 0
        %1052 = vmatpush1.bf16.msra.mxu0 %v1044
        %1053 = vmatprep.subr.bf16.mxu0 0
        %1054 = vmatpush1.bf16.msra.mxu0 %v1045
        %1055 = vmatprep.subr.bf16.mxu0 0
        %1056 = vmatpush1.bf16.msra.mxu0 0
        %1057 = vmatprep.subr.bf16.mxu0 0
        %1058 = vmatpush1.bf16.msra.mxu0 0
        %1059 = vmatprep.subr.bf16.mxu0 0
        %1060 = vmatpush1.bf16.msra.mxu0 0
        %1061 = vmatprep.subr.bf16.mxu0 0
        %1062 = vmatpush1.bf16.msra.mxu0 0
        %1063 = vmatprep.subr.bf16.mxu0 0
        %1064 = vmatpush1.bf16.msra.mxu0 0
        %1065 = vmatprep.subr.bf16.mxu0 0
        %1066 = vmatpush1.bf16.msra.mxu0 0
        %1067 = vmatprep.subr.bf16.mxu0 0
        %1068 = vmatpush1.bf16.msra.mxu0 0
        %1069 = vmatprep.subr.bf16.mxu0 0
        %1070 = vmatpush1.bf16.msra.mxu0 0
        %1071 = vmatprep.subr.bf16.mxu0 0
        %1072 = vmatpush1.bf16.msra.mxu0 0
        %1073 = vmatprep.subr.bf16.mxu0 0
        %1074 = vmatpush1.bf16.msra.mxu0 0
        %1075 = vmatprep.subr.bf16.mxu0 0
        %1076 = vmatpush1.bf16.msra.mxu0 0
        %1077 = vmatprep.subr.bf16.mxu0 0
        %1078 = vmatpush1.bf16.msra.mxu0 0
        %1079 = vmatprep.subr.bf16.mxu0 0
        %1080 = vmatpush1.bf16.msra.mxu0 0
        %1081 = vmatprep.subr.bf16.mxu0 0
        %1082 = vmatpush1.bf16.msra.mxu0 0
        %1083 = vmatprep.mubr.bf16.mxu0 0
        %1084 = vmatmul.mubr.bf16.gmra.mrb[0].mxu0 %v1049
        %v1085 = vpop.f32.mrb[0].mxu0
        %v1086 = vadd.f32 0.0, %v1085
        %v1087 = vpop.f32.mrb[0].mxu0
        %v1088 = vpop.f32.mrb[0].mxu0
        %v1089 = vpop.f32.mrb[0].mxu0
        %1090 = vdwg.mxu0
        %v1091 = vadd.f32 %v1035, %v1086
        %v1093 = vlaneseq
        %v1094 = vshrl.u32 %v1093, 7
        %v1095 = vsub.s32 0, %v1094
        %v1096 = vrot.slane %v868, %v1095
        %v1098 = vadd.f32 %v1091, %v1096
        %vm1099 = vcmask 519168
        %1100 = vst.msk [vmem:[%s621] sm:$0xf] %vm1099, %v1098
        %v1102 = vsel %vm881, %v833, 0
        %1104 = vmatprep.subr.bf16.mxu0 0
        %1105 = vmatpush1.bf16.msra.mxu0 %v877
        %1106 = vmatprep.subr.bf16.mxu0 0
        %1107 = vmatpush1.bf16.msra.mxu0 %v878
        %1108 = vmatprep.subr.bf16.mxu0 0
        %1109 = vmatpush1.bf16.msra.mxu0 0
        %1110 = vmatprep.subr.bf16.mxu0 0
        %1111 = vmatpush1.bf16.msra.mxu0 0
        %1112 = vmatprep.subr.bf16.mxu0 0
        %1113 = vmatpush1.bf16.msra.mxu0 0
        %1114 = vmatprep.subr.bf16.mxu0 0
        %1115 = vmatpush1.bf16.msra.mxu0 0
        %1116 = vmatprep.subr.bf16.mxu0 0
        %1117 = vmatpush1.bf16.msra.mxu0 0
        %1118 = vmatprep.subr.bf16.mxu0 0
        %1119 = vmatpush1.bf16.msra.mxu0 0
        %1120 = vmatprep.subr.bf16.mxu0 0
        %1121 = vmatpush1.bf16.msra.mxu0 0
        %1122 = vmatprep.subr.bf16.mxu0 0
        %1123 = vmatpush1.bf16.msra.mxu0 0
        %1124 = vmatprep.subr.bf16.mxu0 0
        %1125 = vmatpush1.bf16.msra.mxu0 0
        %1126 = vmatprep.subr.bf16.mxu0 0
        %1127 = vmatpush1.bf16.msra.mxu0 0
        %1128 = vmatprep.subr.bf16.mxu0 0
        %1129 = vmatpush1.bf16.msra.mxu0 0
        %1130 = vmatprep.subr.bf16.mxu0 0
        %1131 = vmatpush1.bf16.msra.mxu0 0
        %1132 = vmatprep.subr.bf16.mxu0 0
        %1133 = vmatpush1.bf16.msra.mxu0 0
        %1134 = vmatprep.subr.bf16.mxu0 0
        %1135 = vmatpush1.bf16.msra.mxu0 0
        %1136 = vmatprep.mubr.bf16.mxu0 0
        %1137 = vmatmul.mubr.bf16.gmra.mrb[0].mxu0 %v1102
        %v1138 = vpop.f32.mrb[0].mxu0
        %v1139 = vadd.f32 0.0, %v1138
        %v1140 = vpop.f32.mrb[0].mxu0
        %v1141 = vpop.f32.mrb[0].mxu0
        %v1142 = vpop.f32.mrb[0].mxu0
        %1143 = vdwg.mxu0
        %v1145 = vsel %vm881, %v825, 0
        %1147 = vmatprep.subr.bf16.mxu0 0
        %1148 = vmatpush1.bf16.msra.mxu0 %v933
        %1149 = vmatprep.subr.bf16.mxu0 0
        %1150 = vmatpush1.bf16.msra.mxu0 %v934
        %1151 = vmatprep.subr.bf16.mxu0 0
        %1152 = vmatpush1.bf16.msra.mxu0 0
        %1153 = vmatprep.subr.bf16.mxu0 0
        %1154 = vmatpush1.bf16.msra.mxu0 0
        %1155 = vmatprep.subr.bf16.mxu0 0
        %1156 = vmatpush1.bf16.msra.mxu0 0
        %1157 = vmatprep.subr.bf16.mxu0 0
        %1158 = vmatpush1.bf16.msra.mxu0 0
        %1159 = vmatprep.subr.bf16.mxu0 0
        %1160 = vmatpush1.bf16.msra.mxu0 0
        %1161 = vmatprep.subr.bf16.mxu0 0
        %1162 = vmatpush1.bf16.msra.mxu0 0
        %1163 = vmatprep.subr.bf16.mxu0 0
        %1164 = vmatpush1.bf16.msra.mxu0 0
        %1165 = vmatprep.subr.bf16.mxu0 0
        %1166 = vmatpush1.bf16.msra.mxu0 0
        %1167 = vmatprep.subr.bf16.mxu0 0
        %1168 = vmatpush1.bf16.msra.mxu0 0
        %1169 = vmatprep.subr.bf16.mxu0 0
        %1170 = vmatpush1.bf16.msra.mxu0 0
        %1171 = vmatprep.subr.bf16.mxu0 0
        %1172 = vmatpush1.bf16.msra.mxu0 0
        %1173 = vmatprep.subr.bf16.mxu0 0
        %1174 = vmatpush1.bf16.msra.mxu0 0
        %1175 = vmatprep.subr.bf16.mxu0 0
        %1176 = vmatpush1.bf16.msra.mxu0 0
        %1177 = vmatprep.subr.bf16.mxu0 0
        %1178 = vmatpush1.bf16.msra.mxu0 0
        %1179 = vmatprep.mubr.bf16.mxu0 0
        %1180 = vmatmul.mubr.bf16.gmra.mrb[0].mxu0 %v1145
        %v1181 = vpop.f32.mrb[0].mxu0
        %v1182 = vadd.f32 %v1139, %v1181
        %v1183 = vpop.f32.mrb[0].mxu0
        %v1184 = vpop.f32.mrb[0].mxu0
        %v1185 = vpop.f32.mrb[0].mxu0
        %1186 = vdwg.mxu0
        %v1188 = vsel %vm881, %v841, 0
        %1190 = vmatprep.subr.bf16.mxu0 0
        %1191 = vmatpush1.bf16.msra.mxu0 %v988
        %1192 = vmatprep.subr.bf16.mxu0 0
        %1193 = vmatpush1.bf16.msra.mxu0 %v989
        %1194 = vmatprep.subr.bf16.mxu0 0
        %1195 = vmatpush1.bf16.msra.mxu0 0
        %1196 = vmatprep.subr.bf16.mxu0 0
        %1197 = vmatpush1.bf16.msra.mxu0 0
        %1198 = vmatprep.subr.bf16.mxu0 0
        %1199 = vmatpush1.bf16.msra.mxu0 0
        %1200 = vmatprep.subr.bf16.mxu0 0
        %1201 = vmatpush1.bf16.msra.mxu0 0
        %1202 = vmatprep.subr.bf16.mxu0 0
        %1203 = vmatpush1.bf16.msra.mxu0 0
        %1204 = vmatprep.subr.bf16.mxu0 0
        %1205 = vmatpush1.bf16.msra.mxu0 0
        %1206 = vmatprep.subr.bf16.mxu0 0
        %1207 = vmatpush1.bf16.msra.mxu0 0
        %1208 = vmatprep.subr.bf16.mxu0 0
        %1209 = vmatpush1.bf16.msra.mxu0 0
        %1210 = vmatprep.subr.bf16.mxu0 0
        %1211 = vmatpush1.bf16.msra.mxu0 0
        %1212 = vmatprep.subr.bf16.mxu0 0
        %1213 = vmatpush1.bf16.msra.mxu0 0
        %1214 = vmatprep.subr.bf16.mxu0 0
        %1215 = vmatpush1.bf16.msra.mxu0 0
        %1216 = vmatprep.subr.bf16.mxu0 0
        %1217 = vmatpush1.bf16.msra.mxu0 0
        %1218 = vmatprep.subr.bf16.mxu0 0
        %1219 = vmatpush1.bf16.msra.mxu0 0
        %1220 = vmatprep.subr.bf16.mxu0 0
        %1221 = vmatpush1.bf16.msra.mxu0 0
        %1222 = vmatprep.mubr.bf16.mxu0 0
        %1223 = vmatmul.mubr.bf16.gmra.mrb[0].mxu0 %v1188
        %v1224 = vpop.f32.mrb[0].mxu0
        %v1225 = vadd.f32 0.0, %v1224
        %v1226 = vpop.f32.mrb[0].mxu0
        %v1227 = vpop.f32.mrb[0].mxu0
        %v1228 = vpop.f32.mrb[0].mxu0
        %1229 = vdwg.mxu0
        %v1230 = vadd.f32 %v1182, %v1225
        %v1232 = vsel %vm881, %v849, 0
        %1234 = vmatprep.subr.bf16.mxu0 0
        %1235 = vmatpush1.bf16.msra.mxu0 %v1044
        %1236 = vmatprep.subr.bf16.mxu0 0
        %1237 = vmatpush1.bf16.msra.mxu0 %v1045
        %1238 = vmatprep.subr.bf16.mxu0 0
        %1239 = vmatpush1.bf16.msra.mxu0 0
        %1240 = vmatprep.subr.bf16.mxu0 0
        %1241 = vmatpush1.bf16.msra.mxu0 0
        %1242 = vmatprep.subr.bf16.mxu0 0
        %1243 = vmatpush1.bf16.msra.mxu0 0
        %1244 = vmatprep.subr.bf16.mxu0 0
        %1245 = vmatpush1.bf16.msra.mxu0 0
        %1246 = vmatprep.subr.bf16.mxu0 0
        %1247 = vmatpush1.bf16.msra.mxu0 0
        %1248 = vmatprep.subr.bf16.mxu0 0
        %1249 = vmatpush1.bf16.msra.mxu0 0
        %1250 = vmatprep.subr.bf16.mxu0 0
        %1251 = vmatpush1.bf16.msra.mxu0 0
        %1252 = vmatprep.subr.bf16.mxu0 0
        %1253 = vmatpush1.bf16.msra.mxu0 0
        %1254 = vmatprep.subr.bf16.mxu0 0
        %1255 = vmatpush1.bf16.msra.mxu0 0
        %1256 = vmatprep.subr.bf16.mxu0 0
        %1257 = vmatpush1.bf16.msra.mxu0 0
        %1258 = vmatprep.subr.bf16.mxu0 0
        %1259 = vmatpush1.bf16.msra.mxu0 0
        %1260 = vmatprep.subr.bf16.mxu0 0
        %1261 = vmatpush1.bf16.msra.mxu0 0
        %1262 = vmatprep.subr.bf16.mxu0 0
        %1263 = vmatpush1.bf16.msra.mxu0 0
        %1264 = vmatprep.subr.bf16.mxu0 0
        %1265 = vmatpush1.bf16.msra.mxu0 0
        %1266 = vmatprep.mubr.bf16.mxu0 0
        %1267 = vmatmul.mubr.bf16.gmra.mrb[0].mxu0 %v1232
        %v1268 = vpop.f32.mrb[0].mxu0
        %v1269 = vadd.f32 0.0, %v1268
        %v1270 = vpop.f32.mrb[0].mxu0
        %v1271 = vpop.f32.mrb[0].mxu0
        %v1272 = vpop.f32.mrb[0].mxu0
        %1273 = vdwg.mxu0
        %v1274 = vadd.f32 %v1230, %v1269
        %v1275 = vadd.f32 %v1274, %v1096
        %s1276 = scalar_lea.vmem %s621, 4 [#allocation6]
        %1277 = vst.msk [vmem:[%s1276] sm:$0xf] %vm1099, %v1275
        %v1279 = vsel %vm881, %v834, 0
        %1281 = vmatprep.subr.bf16.mxu0 0
        %1282 = vmatpush1.bf16.msra.mxu0 %v877
        %1283 = vmatprep.subr.bf16.mxu0 0
        %1284 = vmatpush1.bf16.msra.mxu0 %v878
        %1285 = vmatprep.subr.bf16.mxu0 0
        %1286 = vmatpush1.bf16.msra.mxu0 0
        %1287 = vmatprep.subr.bf16.mxu0 0
        %1288 = vmatpush1.bf16.msra.mxu0 0
        %1289 = vmatprep.subr.bf16.mxu0 0
        %1290 = vmatpush1.bf16.msra.mxu0 0
        %1291 = vmatprep.subr.bf16.mxu0 0
        %1292 = vmatpush1.bf16.msra.mxu0 0
        %1293 = vmatprep.subr.bf16.mxu0 0
        %1294 = vmatpush1.bf16.msra.mxu0 0
        %1295 = vmatprep.subr.bf16.mxu0 0
        %1296 = vmatpush1.bf16.msra.mxu0 0
        %1297 = vmatprep.subr.bf16.mxu0 0
        %1298 = vmatpush1.bf16.msra.mxu0 0
        %1299 = vmatprep.subr.bf16.mxu0 0
        %1300 = vmatpush1.bf16.msra.mxu0 0
        %1301 = vmatprep.subr.bf16.mxu0 0
        %1302 = vmatpush1.bf16.msra.mxu0 0
        %1303 = vmatprep.subr.bf16.mxu0 0
        %1304 = vmatpush1.bf16.msra.mxu0 0
        %1305 = vmatprep.subr.bf16.mxu0 0
        %1306 = vmatpush1.bf16.msra.mxu0 0
        %1307 = vmatprep.subr.bf16.mxu0 0
        %1308 = vmatpush1.bf16.msra.mxu0 0
        %1309 = vmatprep.subr.bf16.mxu0 0
        %1310 = vmatpush1.bf16.msra.mxu0 0
        %1311 = vmatprep.subr.bf16.mxu0 0
        %1312 = vmatpush1.bf16.msra.mxu0 0
        %1313 = vmatprep.mubr.bf16.mxu0 0
        %1314 = vmatmul.mubr.bf16.gmra.mrb[0].mxu0 %v1279
        %v1315 = vpop.f32.mrb[0].mxu0
        %v1316 = vadd.f32 0.0, %v1315
        %v1317 = vpop.f32.mrb[0].mxu0
        %v1318 = vpop.f32.mrb[0].mxu0
        %v1319 = vpop.f32.mrb[0].mxu0
        %1320 = vdwg.mxu0
        %v1322 = vsel %vm881, %v826, 0
        %1324 = vmatprep.subr.bf16.mxu0 0
        %1325 = vmatpush1.bf16.msra.mxu0 %v933
        %1326 = vmatprep.subr.bf16.mxu0 0
        %1327 = vmatpush1.bf16.msra.mxu0 %v934
        %1328 = vmatprep.subr.bf16.mxu0 0
        %1329 = vmatpush1.bf16.msra.mxu0 0
        %1330 = vmatprep.subr.bf16.mxu0 0
        %1331 = vmatpush1.bf16.msra.mxu0 0
        %1332 = vmatprep.subr.bf16.mxu0 0
        %1333 = vmatpush1.bf16.msra.mxu0 0
        %1334 = vmatprep.subr.bf16.mxu0 0
        %1335 = vmatpush1.bf16.msra.mxu0 0
        %1336 = vmatprep.subr.bf16.mxu0 0
        %1337 = vmatpush1.bf16.msra.mxu0 0
        %1338 = vmatprep.subr.bf16.mxu0 0
        %1339 = vmatpush1.bf16.msra.mxu0 0
        %1340 = vmatprep.subr.bf16.mxu0 0
        %1341 = vmatpush1.bf16.msra.mxu0 0
        %1342 = vmatprep.subr.bf16.mxu0 0
        %1343 = vmatpush1.bf16.msra.mxu0 0
        %1344 = vmatprep.subr.bf16.mxu0 0
        %1345 = vmatpush1.bf16.msra.mxu0 0
        %1346 = vmatprep.subr.bf16.mxu0 0
        %1347 = vmatpush1.bf16.msra.mxu0 0
        %1348 = vmatprep.subr.bf16.mxu0 0
        %1349 = vmatpush1.bf16.msra.mxu0 0
        %1350 = vmatprep.subr.bf16.mxu0 0
        %1351 = vmatpush1.bf16.msra.mxu0 0
        %1352 = vmatprep.subr.bf16.mxu0 0
        %1353 = vmatpush1.bf16.msra.mxu0 0
        %1354 = vmatprep.subr.bf16.mxu0 0
        %1355 = vmatpush1.bf16.msra.mxu0 0
        %1356 = vmatprep.mubr.bf16.mxu0 0
        %1357 = vmatmul.mubr.bf16.gmra.mrb[0].mxu0 %v1322
        %v1358 = vpop.f32.mrb[0].mxu0
        %v1359 = vadd.f32 %v1316, %v1358
        %v1360 = vpop.f32.mrb[0].mxu0
        %v1361 = vpop.f32.mrb[0].mxu0
        %v1362 = vpop.f32.mrb[0].mxu0
        %1363 = vdwg.mxu0
        %v1365 = vsel %vm881, %v842, 0
        %1367 = vmatprep.subr.bf16.mxu0 0
        %1368 = vmatpush1.bf16.msra.mxu0 %v988
        %1369 = vmatprep.subr.bf16.mxu0 0
        %1370 = vmatpush1.bf16.msra.mxu0 %v989
        %1371 = vmatprep.subr.bf16.mxu0 0
        %1372 = vmatpush1.bf16.msra.mxu0 0
        %1373 = vmatprep.subr.bf16.mxu0 0
        %1374 = vmatpush1.bf16.msra.mxu0 0
        %1375 = vmatprep.subr.bf16.mxu0 0
        %1376 = vmatpush1.bf16.msra.mxu0 0
        %1377 = vmatprep.subr.bf16.mxu0 0
        %1378 = vmatpush1.bf16.msra.mxu0 0
        %1379 = vmatprep.subr.bf16.mxu0 0
        %1380 = vmatpush1.bf16.msra.mxu0 0
        %1381 = vmatprep.subr.bf16.mxu0 0
        %1382 = vmatpush1.bf16.msra.mxu0 0
        %1383 = vmatprep.subr.bf16.mxu0 0
        %1384 = vmatpush1.bf16.msra.mxu0 0
        %1385 = vmatprep.subr.bf16.mxu0 0
        %1386 = vmatpush1.bf16.msra.mxu0 0
        %1387 = vmatprep.subr.bf16.mxu0 0
        %1388 = vmatpush1.bf16.msra.mxu0 0
        %1389 = vmatprep.subr.bf16.mxu0 0
        %1390 = vmatpush1.bf16.msra.mxu0 0
        %1391 = vmatprep.subr.bf16.mxu0 0
        %1392 = vmatpush1.bf16.msra.mxu0 0
        %1393 = vmatprep.subr.bf16.mxu0 0
        %1394 = vmatpush1.bf16.msra.mxu0 0
        %1395 = vmatprep.subr.bf16.mxu0 0
        %1396 = vmatpush1.bf16.msra.mxu0 0
        %1397 = vmatprep.subr.bf16.mxu0 0
        %1398 = vmatpush1.bf16.msra.mxu0 0
        %1399 = vmatprep.mubr.bf16.mxu0 0
        %1400 = vmatmul.mubr.bf16.gmra.mrb[0].mxu0 %v1365
        %v1401 = vpop.f32.mrb[0].mxu0
        %v1402 = vadd.f32 0.0, %v1401
        %v1403 = vpop.f32.mrb[0].mxu0
        %v1404 = vpop.f32.mrb[0].mxu0
        %v1405 = vpop.f32.mrb[0].mxu0
        %1406 = vdwg.mxu0
        %v1407 = vadd.f32 %v1359, %v1402
        %v1409 = vsel %vm881, %v850, 0
        %1411 = vmatprep.subr.bf16.mxu0 0
        %1412 = vmatpush1.bf16.msra.mxu0 %v1044
        %1413 = vmatprep.subr.bf16.mxu0 0
        %1414 = vmatpush1.bf16.msra.mxu0 %v1045
        %1415 = vmatprep.subr.bf16.mxu0 0
        %1416 = vmatpush1.bf16.msra.mxu0 0
        %1417 = vmatprep.subr.bf16.mxu0 0
        %1418 = vmatpush1.bf16.msra.mxu0 0
        %1419 = vmatprep.subr.bf16.mxu0 0
        %1420 = vmatpush1.bf16.msra.mxu0 0
        %1421 = vmatprep.subr.bf16.mxu0 0
        %1422 = vmatpush1.bf16.msra.mxu0 0
        %1423 = vmatprep.subr.bf16.mxu0 0
        %1424 = vmatpush1.bf16.msra.mxu0 0
        %1425 = vmatprep.subr.bf16.mxu0 0
        %1426 = vmatpush1.bf16.msra.mxu0 0
        %1427 = vmatprep.subr.bf16.mxu0 0
        %1428 = vmatpush1.bf16.msra.mxu0 0
        %1429 = vmatprep.subr.bf16.mxu0 0
        %1430 = vmatpush1.bf16.msra.mxu0 0
        %1431 = vmatprep.subr.bf16.mxu0 0
        %1432 = vmatpush1.bf16.msra.mxu0 0
        %1433 = vmatprep.subr.bf16.mxu0 0
        %1434 = vmatpush1.bf16.msra.mxu0 0
        %1435 = vmatprep.subr.bf16.mxu0 0
        %1436 = vmatpush1.bf16.msra.mxu0 0
        %1437 = vmatprep.subr.bf16.mxu0 0
        %1438 = vmatpush1.bf16.msra.mxu0 0
        %1439 = vmatprep.subr.bf16.mxu0 0
        %1440 = vmatpush1.bf16.msra.mxu0 0
        %1441 = vmatprep.subr.bf16.mxu0 0
        %1442 = vmatpush1.bf16.msra.mxu0 0
        %1443 = vmatprep.mubr.bf16.mxu0 0
        %1444 = vmatmul.mubr.bf16.gmra.mrb[0].mxu0 %v1409
        %v1445 = vpop.f32.mrb[0].mxu0
        %v1446 = vadd.f32 0.0, %v1445
        %v1447 = vpop.f32.mrb[0].mxu0
        %v1448 = vpop.f32.mrb[0].mxu0
        %v1449 = vpop.f32.mrb[0].mxu0
        %1450 = vdwg.mxu0
        %v1451 = vadd.f32 %v1407, %v1446
        %v1452 = vadd.f32 %v1451, %v1096
        %s1453 = scalar_lea.vmem %s621, 8 [#allocation6]
        %1454 = vst.msk [vmem:[%s1453] sm:$0xf] %vm1099, %v1452
        %v1456 = vsel %vm881, %v835, 0
        %1458 = vmatprep.subr.bf16.mxu0 0
        %1459 = vmatpush1.bf16.msra.mxu0 %v877
        %1460 = vmatprep.subr.bf16.mxu0 0
        %1461 = vmatpush1.bf16.msra.mxu0 %v878
        %1462 = vmatprep.subr.bf16.mxu0 0
        %1463 = vmatpush1.bf16.msra.mxu0 0
        %1464 = vmatprep.subr.bf16.mxu0 0
        %1465 = vmatpush1.bf16.msra.mxu0 0
        %1466 = vmatprep.subr.bf16.mxu0 0
        %1467 = vmatpush1.bf16.msra.mxu0 0
        %1468 = vmatprep.subr.bf16.mxu0 0
        %1469 = vmatpush1.bf16.msra.mxu0 0
        %1470 = vmatprep.subr.bf16.mxu0 0
        %1471 = vmatpush1.bf16.msra.mxu0 0
        %1472 = vmatprep.subr.bf16.mxu0 0
        %1473 = vmatpush1.bf16.msra.mxu0 0
        %1474 = vmatprep.subr.bf16.mxu0 0
        %1475 = vmatpush1.bf16.msra.mxu0 0
        %1476 = vmatprep.subr.bf16.mxu0 0
        %1477 = vmatpush1.bf16.msra.mxu0 0
        %1478 = vmatprep.subr.bf16.mxu0 0
        %1479 = vmatpush1.bf16.msra.mxu0 0
        %1480 = vmatprep.subr.bf16.mxu0 0
        %1481 = vmatpush1.bf16.msra.mxu0 0
        %1482 = vmatprep.subr.bf16.mxu0 0
        %1483 = vmatpush1.bf16.msra.mxu0 0
        %1484 = vmatprep.subr.bf16.mxu0 0
        %1485 = vmatpush1.bf16.msra.mxu0 0
        %1486 = vmatprep.subr.bf16.mxu0 0
        %1487 = vmatpush1.bf16.msra.mxu0 0
        %1488 = vmatprep.subr.bf16.mxu0 0
        %1489 = vmatpush1.bf16.msra.mxu0 0
        %1490 = vmatprep.mubr.bf16.mxu0 0
        %1491 = vmatmul.mubr.bf16.gmra.mrb[0].mxu0 %v1456
        %v1492 = vpop.f32.mrb[0].mxu0
        %v1493 = vadd.f32 0.0, %v1492
        %v1494 = vpop.f32.mrb[0].mxu0
        %v1495 = vpop.f32.mrb[0].mxu0
        %v1496 = vpop.f32.mrb[0].mxu0
        %1497 = vdwg.mxu0
        %v1499 = vsel %vm881, %v827, 0
        %1501 = vmatprep.subr.bf16.mxu0 0
        %1502 = vmatpush1.bf16.msra.mxu0 %v933
        %1503 = vmatprep.subr.bf16.mxu0 0
        %1504 = vmatpush1.bf16.msra.mxu0 %v934
        %1505 = vmatprep.subr.bf16.mxu0 0
        %1506 = vmatpush1.bf16.msra.mxu0 0
        %1507 = vmatprep.subr.bf16.mxu0 0
        %1508 = vmatpush1.bf16.msra.mxu0 0
        %1509 = vmatprep.subr.bf16.mxu0 0
        %1510 = vmatpush1.bf16.msra.mxu0 0
        %1511 = vmatprep.subr.bf16.mxu0 0
        %1512 = vmatpush1.bf16.msra.mxu0 0
        %1513 = vmatprep.subr.bf16.mxu0 0
        %1514 = vmatpush1.bf16.msra.mxu0 0
        %1515 = vmatprep.subr.bf16.mxu0 0
        %1516 = vmatpush1.bf16.msra.mxu0 0
        %1517 = vmatprep.subr.bf16.mxu0 0
        %1518 = vmatpush1.bf16.msra.mxu0 0
        %1519 = vmatprep.subr.bf16.mxu0 0
        %1520 = vmatpush1.bf16.msra.mxu0 0
        %1521 = vmatprep.subr.bf16.mxu0 0
        %1522 = vmatpush1.bf16.msra.mxu0 0
        %1523 = vmatprep.subr.bf16.mxu0 0
        %1524 = vmatpush1.bf16.msra.mxu0 0
        %1525 = vmatprep.subr.bf16.mxu0 0
        %1526 = vmatpush1.bf16.msra.mxu0 0
        %1527 = vmatprep.subr.bf16.mxu0 0
        %1528 = vmatpush1.bf16.msra.mxu0 0
        %1529 = vmatprep.subr.bf16.mxu0 0
        %1530 = vmatpush1.bf16.msra.mxu0 0
        %1531 = vmatprep.subr.bf16.mxu0 0
        %1532 = vmatpush1.bf16.msra.mxu0 0
        %1533 = vmatprep.mubr.bf16.mxu0 0
        %1534 = vmatmul.mubr.bf16.gmra.mrb[0].mxu0 %v1499
        %v1535 = vpop.f32.mrb[0].mxu0
        %v1536 = vadd.f32 %v1493, %v1535
        %v1537 = vpop.f32.mrb[0].mxu0
        %v1538 = vpop.f32.mrb[0].mxu0
        %v1539 = vpop.f32.mrb[0].mxu0
        %1540 = vdwg.mxu0
        %v1542 = vsel %vm881, %v843, 0
        %1544 = vmatprep.subr.bf16.mxu0 0
        %1545 = vmatpush1.bf16.msra.mxu0 %v988
        %1546 = vmatprep.subr.bf16.mxu0 0
        %1547 = vmatpush1.bf16.msra.mxu0 %v989
        %1548 = vmatprep.subr.bf16.mxu0 0
        %1549 = vmatpush1.bf16.msra.mxu0 0
        %1550 = vmatprep.subr.bf16.mxu0 0
        %1551 = vmatpush1.bf16.msra.mxu0 0
        %1552 = vmatprep.subr.bf16.mxu0 0
        %1553 = vmatpush1.bf16.msra.mxu0 0
        %1554 = vmatprep.subr.bf16.mxu0 0
        %1555 = vmatpush1.bf16.msra.mxu0 0
        %1556 = vmatprep.subr.bf16.mxu0 0
        %1557 = vmatpush1.bf16.msra.mxu0 0
        %1558 = vmatprep.subr.bf16.mxu0 0
        %1559 = vmatpush1.bf16.msra.mxu0 0
        %1560 = vmatprep.subr.bf16.mxu0 0
        %1561 = vmatpush1.bf16.msra.mxu0 0
        %1562 = vmatprep.subr.bf16.mxu0 0
        %1563 = vmatpush1.bf16.msra.mxu0 0
        %1564 = vmatprep.subr.bf16.mxu0 0
        %1565 = vmatpush1.bf16.msra.mxu0 0
        %1566 = vmatprep.subr.bf16.mxu0 0
        %1567 = vmatpush1.bf16.msra.mxu0 0
        %1568 = vmatprep.subr.bf16.mxu0 0
        %1569 = vmatpush1.bf16.msra.mxu0 0
        %1570 = vmatprep.subr.bf16.mxu0 0
        %1571 = vmatpush1.bf16.msra.mxu0 0
        %1572 = vmatprep.subr.bf16.mxu0 0
        %1573 = vmatpush1.bf16.msra.mxu0 0
        %1574 = vmatprep.subr.bf16.mxu0 0
        %1575 = vmatpush1.bf16.msra.mxu0 0
        %1576 = vmatprep.mubr.bf16.mxu0 0
        %1577 = vmatmul.mubr.bf16.gmra.mrb[0].mxu0 %v1542
        %v1578 = vpop.f32.mrb[0].mxu0
        %v1579 = vadd.f32 0.0, %v1578
        %v1580 = vpop.f32.mrb[0].mxu0
        %v1581 = vpop.f32.mrb[0].mxu0
        %v1582 = vpop.f32.mrb[0].mxu0
        %1583 = vdwg.mxu0
        %v1584 = vadd.f32 %v1536, %v1579
        %v1586 = vsel %vm881, %v851, 0
        %1588 = vmatprep.subr.bf16.mxu0 0
        %1589 = vmatpush1.bf16.msra.mxu0 %v1044
        %1590 = vmatprep.subr.bf16.mxu0 0
        %1591 = vmatpush1.bf16.msra.mxu0 %v1045
        %1592 = vmatprep.subr.bf16.mxu0 0
        %1593 = vmatpush1.bf16.msra.mxu0 0
        %1594 = vmatprep.subr.bf16.mxu0 0
        %1595 = vmatpush1.bf16.msra.mxu0 0
        %1596 = vmatprep.subr.bf16.mxu0 0
        %1597 = vmatpush1.bf16.msra.mxu0 0
        %1598 = vmatprep.subr.bf16.mxu0 0
        %1599 = vmatpush1.bf16.msra.mxu0 0
        %1600 = vmatprep.subr.bf16.mxu0 0
        %1601 = vmatpush1.bf16.msra.mxu0 0
        %1602 = vmatprep.subr.bf16.mxu0 0
        %1603 = vmatpush1.bf16.msra.mxu0 0
        %1604 = vmatprep.subr.bf16.mxu0 0
        %1605 = vmatpush1.bf16.msra.mxu0 0
        %1606 = vmatprep.subr.bf16.mxu0 0
        %1607 = vmatpush1.bf16.msra.mxu0 0
        %1608 = vmatprep.subr.bf16.mxu0 0
        %1609 = vmatpush1.bf16.msra.mxu0 0
        %1610 = vmatprep.subr.bf16.mxu0 0
        %1611 = vmatpush1.bf16.msra.mxu0 0
        %1612 = vmatprep.subr.bf16.mxu0 0
        %1613 = vmatpush1.bf16.msra.mxu0 0
        %1614 = vmatprep.subr.bf16.mxu0 0
        %1615 = vmatpush1.bf16.msra.mxu0 0
        %1616 = vmatprep.subr.bf16.mxu0 0
        %1617 = vmatpush1.bf16.msra.mxu0 0
        %1618 = vmatprep.subr.bf16.mxu0 0
        %1619 = vmatpush1.bf16.msra.mxu0 0
        %1620 = vmatprep.mubr.bf16.mxu0 0
        %1621 = vmatmul.mubr.bf16.gmra.mrb[0].mxu0 %v1586
        %v1622 = vpop.f32.mrb[0].mxu0
        %v1623 = vadd.f32 0.0, %v1622
        %v1624 = vpop.f32.mrb[0].mxu0
        %v1625 = vpop.f32.mrb[0].mxu0
        %v1626 = vpop.f32.mrb[0].mxu0
        %1627 = vdwg.mxu0
        %v1628 = vadd.f32 %v1584, %v1623
        %v1629 = vadd.f32 %v1628, %v1096
        %s1630 = scalar_lea.vmem %s621, 12 [#allocation6]
        %1631 = vst.msk [vmem:[%s1630] sm:$0xf] %vm1099, %v1629
        %s1632 = sand.u32 %s232, 1
        %s1633 = scalar_lea.sflag [#allocation7], %s1632
        %s1634 = sand.u32 %s232, 1
        %s1635 = smul.addr %s1634, 16
        %s1636 = scalar_lea.vmem [#allocation6], %s1635
        // Predicated region
        $region209: #{_lambda_.1} parent=191 // pred_check
          %p1637 = pneg %p242
        $region210: #{_lambda_.1} parent=191 // pred_check_branch
          %1639 = sbr.rel (%p1637) target = $region212
        $region211: #{_lambda_.1} parent=191 // pred_region
          %s1640 = smul.u32 4, %s28
          %s1642 = ssub.s32 256, 256
          %1643 = vsyncadd %s1633, %s1642
          %s1644 = sadd.s32 %s29, %s1640
          %s1645 = smul.addr %s27, 4
          %s1646 = sadd.s32 %s1644, %s1645
          %s1647 = smul.addr %s26, 16
          %s1648 = sadd.s32 %s1646, %s1647
          %s1649 = smul.addr %s1648, 64
          %s1650 = scalar_lea.hbm %s6, %s1649
          %s1651 = sshll.u32 %s1636, 4
          %s1652 = int_to_ptr.vmem [resolvable:$true] %s1651
          %1657 = dma.vmem_to_hbm [thread:$0]  %s1652, 256, %s1650, %s1633, 64, 64, 4
        $region212: #{_lambda_.1} parent=191 // pred_fallthru
          _
      $region192: #{_lambda_.1} parent=5 // pred_fallthru
        _
      %p1658 = scmp.le.s32.totalorder 2, %s15
      // Predicated region
      $region213: #{_lambda_.1} parent=5 // pred_check
        %p1659 = pneg %p1658
      $region214: #{_lambda_.1} parent=5 // pred_check_branch
        %1661 = sbr.rel (%p1659) target = $region216
      $region215: #{_lambda_.1} parent=5 // pred_region
        %s1662 = ssub.s32 %s15, 2
        // Predicated region
        $region217: #{_lambda_.1} parent=215 // pred_check
          %p1663 = pneg %p248
        $region218: #{_lambda_.1} parent=215 // pred_check_branch
          %1665 = sbr.rel (%p1663) target = $region220
        $region219: #{_lambda_.1} parent=215 // pred_region
          %s1666 = sand.u32 %s233, 1
          %s1667 = scalar_lea.sflag [#allocation7], %s1666
          %s1668 = sand.u32 %s233, 1
          %s1669 = smul.addr %s1668, 16
          %s1670 = scalar_lea.vmem [#allocation6], %s1669
          %1671 = dma.done %s1667, 256
        $region220: #{_lambda_.1} parent=215 // pred_fallthru
          _
      $region216: #{_lambda_.1} parent=5 // pred_fallthru
        _
    $region6: #{_lambda_.1} parent=1 // loop_footer
      %s19 = sadd.s32 1, %s15
    $region7: #{_lambda_.1} parent=1 // loop_footer_branch
      %14 = sbr.rel target = $region3
    $region8: #{_lambda_.1} parent=1 // loop_exit
      _
    %1672 = vsyncpa [#allocation7], 1
    %s1673 = scalar_lea.sflag [#allocation7], 1
    %1674 = vsyncpa %s1673, 1

</llo_original>
